<compile_context>
chip_gen: v7x
topology: tpu7x:2x2x1
jax: 0.10.0
libtpu: 0.0.40
codegen_flags: <defaults>
</compile_context>

<pallas_src>
import jax
import jax.numpy as jnp
from jax.experimental import pallas as pl
from jax.experimental.pallas import tpu as pltpu


def _round_up(v, m):
    return (v + m - 1) // m * m


def _vmem_capacity_bytes():
    """Physical VMEM per TensorCore (128 MiB on v5e/v6e, 64 MiB on v7x)."""
    default = 64 * 1024 * 1024          # conservative (v7x)
    try:
        info = pltpu.get_tpu_info()
    except Exception:
        return default
    for name in ("vmem_capacity_bytes", "vmem_size_bytes", "vmem_bytes"):
        val = getattr(info, name, None)
        if val:
            return int(val)
    return default


def _pick_batch_tile(n, per_image_bytes, fixed_bytes, budget_bytes):
    """Largest divisor of n that fits the VMEM budget; keep >= 2 grid steps when
    n >= 2 so the (parallel) batch axis still gives v7x megacore work to shard."""
    divisors = [d for d in range(1, n + 1) if n % d == 0]
    fitting = [d for d in divisors if fixed_bytes + d * per_image_bytes <= budget_bytes]
    if not fitting:
        # TODO(synk): H-row tiling with a K-1 halo for single images too large for VMEM.
        fitting = [1]
    if n >= 2:
        two_step = [d for d in fitting if n // d >= 2]
        if two_step:
            fitting = two_step
    return max(fitting)


def _build_kernel(*, b_tile, c_in, c_out, k, stride, padding, h, w,
                  hp, wp, h_out, w_out, c_in_mat, use_mxu):
    kk = k * k
    s_flat = h_out * w_out
    h_full = hp - k + 1          # stride-1 depthwise extent (== h_out when stride == 1)
    w_full = wp - k + 1

    def kernel(x_ref, wdw_ref, wpw_ref, beff_ref, o_ref, xpad_ref, dwflat_ref):
        f32 = jnp.float32

        # ---- in-kernel zero padding (replaces the old wrapper jnp.pad, which cost a
        #      whole extra HBM read+write of the activations).  Only the border needs
        #      re-zeroing each step; the interior is overwritten just below.
        if padding > 0:
            zrow = jnp.zeros((b_tile, c_in, padding, wp), f32)
            xpad_ref[:, :, 0:padding, :] = zrow
            xpad_ref[:, :, padding + h:hp, :] = zrow
            zcol = jnp.zeros((b_tile, c_in, hp, padding), f32)
            xpad_ref[:, :, :, 0:padding] = zcol
            xpad_ref[:, :, :, padding + w:wp] = zcol
        # single f32 upcast of the activation block (one cast instead of one per tap)
        xpad_ref[:, :, padding:padding + h, padding:padding + w] = x_ref[...].astype(f32)

        # zero the padded (unused) slab rows once so the MXU contraction sees zeros
        if use_mxu and c_in_mat > c_in:
            dwflat_ref[c_in:c_in_mat, :] = jnp.zeros((c_in_mat - c_in, s_flat), f32)

        if stride > 1:
            # 0/1 column-selection matrix: W-decimation done on the MXU, so no
            # lane-strided access is needed.
            sel_w = (jax.lax.broadcasted_iota(jnp.int32, (w_full, w_out), 0)
                     == stride * jax.lax.broadcasted_iota(jnp.int32, (w_full, w_out), 1)
                     ).astype(f32)

        for b in range(b_tile):
            # ---- depthwise KxK, one channel at a time; every plane is streamed
            #      straight into the lane-dense (c_in, h_out*w_out) slab so at most
            #      one plane is ever live in vregs (no spill pile-up).
            for ci in range(c_in):
                wts = [wdw_ref[ci * kk + t] for t in range(kk)]   # hoisted scalar reads
                acc = jnp.zeros((h_full, w_full), f32)
                for kh in range(k):
                    rows = xpad_ref[b, ci, kh:kh + h_full, :]     # one load per kh
                    for kw in range(k):
                        acc = acc + rows[:, kw:kw + w_full] * wts[kh * k + kw]
                if stride > 1:
                    acc = jnp.dot(acc, sel_w, preferred_element_type=f32)  # (h_full, w_out)
                # flatten spatial into the lane axis; the static row pick (r*stride)
                # implements the H stride for free.
                for r in range(h_out):
                    src = r * stride
                    dwflat_ref[ci:ci + 1, r * w_out:(r + 1) * w_out] = acc[src:src + 1, :]

            # ---- pointwise 1x1 + folded bias on the lane-dense slab
            if use_mxu:
                res = jnp.dot(wpw_ref[...], dwflat_ref[...],
                              preferred_element_type=jnp.float32)          # (c_out_pad, S)
                res = res[:c_out, :] + beff_ref[...]
                o_ref[b] = res.astype(o_ref.dtype)
            else:
                # tiny-channel path (c_in*c_out < 64): dense VPU scalar-FMAs, exact f32
                for co in range(c_out):
                    row = dwflat_ref[0:1, :] * wpw_ref[co * c_in]
                    for cj in range(1, c_in):
                        row = row + dwflat_ref[cj:cj + 1, :] * wpw_ref[co * c_in + cj]
                    row = row + beff_ref[co:co + 1, :]
                    o_ref[b, co:co + 1, :] = row.astype(o_ref.dtype)

    return kernel


def dconv2d(x, w_dw, b_dw, w_pw, b_pw, *, stride=1, padding=0, groups=None):
    """Fused depthwise + pointwise conv matching DConv2d.forward.

    x    : (N, C_in, H, W)        NCHW activations
    w_dw : (C_in, 1, K, K)        depthwise weight (PyTorch layout, groups=C_in)
    b_dw : (C_in,)                depthwise bias   (pass zeros for bias=False)
    w_pw : (C_out, C_in, 1, 1)    pointwise weight
    b_pw : (C_out,)               pointwise bias   (pass zeros for bias=False)
    """
    n, c_in, h, w = x.shape
    if groups is None:
        groups = c_in
    if groups != c_in:
        # TODO(synk): general grouped conv (groups != in_channels) not implemented.
        raise NotImplementedError("only depthwise grouping (groups == in_channels) is supported")
    c_out = w_pw.shape[0]
    k = w_dw.shape[-1]
    assert w_dw.shape == (c_in, 1, k, k)
    assert w_pw.shape == (c_out, c_in, 1, 1)
    assert b_dw.shape == (c_in,) and b_pw.shape == (c_out,)

    hp, wp = h + 2 * padding, w + 2 * padding
    assert hp >= k and wp >= k, "kernel larger than padded input"
    h_out = (hp - k) // stride + 1
    w_out = (wp - k) // stride + 1
    s_flat = h_out * w_out

    f32 = jnp.float32
    wdw_flat = w_dw.astype(f32).reshape(c_in * k * k)
    wpw2 = w_pw.astype(f32).reshape(c_out, c_in)
    # Fold the depthwise bias through the 1x1 conv (exact):
    #   pw(dw(x) + b_dw) == W_pw @ dw(x) + (W_pw @ b_dw + b_pw)
    # computed element-wise so it stays exact f32 regardless of matmul precision.
    b_eff = ((wpw2 * b_dw.astype(f32)[None, :]).sum(axis=1) + b_pw.astype(f32)).reshape(c_out, 1)

    use_mxu = (c_in * c_out) >= 64
    if use_mxu:
        c_in_mat = _round_up(c_in, 8)
        c_out_mat = _round_up(c_out, 8)
        wpw_arg = jnp.zeros((c_out_mat, c_in_mat), f32).at[:c_out, :c_in].set(wpw2)
    else:
        c_in_mat = c_in
        c_out_mat = c_out
        wpw_arg = wpw2.reshape(c_out * c_in)        # SMEM scalars for the tiny-channel path

    # ---- generation-aware batch tiling / VMEM budget --------------------------------
    vmem_cap = _vmem_capacity_bytes()
    budget = (2 * vmem_cap) // 3
    itemsize = int(jnp.dtype(x.dtype).itemsize)
    per_image = (2 * c_in * h * w * itemsize          # double-buffered input block
                 + 2 * c_out * s_flat * itemsize      # double-buffered output block
                 + c_in * hp * wp * 4)                # padded f32 staging scratch
    fixed = (c_in_mat * s_flat * 4                    # lane-dense depthwise slab
             + c_out_mat * max(c_in_mat, 128) * 4     # pointwise weights (tile-padded)
             + c_out * 128 * 4                        # folded bias (tile-padded)
             + (2 << 20))                             # headroom
    b_tile = _pick_batch_tile(n, per_image, fixed, budget)
    vmem_limit = int(min(max(vmem_cap - (2 << 20), 16 << 20),
                         max(fixed + b_tile * per_image + (8 << 20), 32 << 20)))
    assert n % b_tile == 0

    kernel = _build_kernel(b_tile=b_tile, c_in=c_in, c_out=c_out, k=k, stride=stride,
                           padding=padding, h=h, w=w, hp=hp, wp=wp,
                           h_out=h_out, w_out=w_out, c_in_mat=c_in_mat, use_mxu=use_mxu)

    smem = pltpu.MemorySpace.SMEM
    if use_mxu:
        wpw_spec = pl.BlockSpec((c_out_mat, c_in_mat), lambda i: (0, 0))   # VMEM, MXU operand
    else:
        wpw_spec = pl.BlockSpec(memory_space=smem)                         # SMEM scalars

    out_flat = pl.pallas_call(
        kernel,
        out_shape=jax.ShapeDtypeStruct((n, c_out, s_flat), x.dtype),
        grid_spec=pltpu.PrefetchScalarGridSpec(
            num_scalar_prefetch=0,
            grid=(n // b_tile,),
            in_specs=[
                pl.BlockSpec((b_tile, c_in, h, w), lambda i: (i, 0, 0, 0)),  # unpadded x
                pl.BlockSpec(memory_space=smem),                             # depthwise weights
                wpw_spec,                                                    # pointwise weights
                pl.BlockSpec((c_out, 1), lambda i: (0, 0)),                  # folded bias
            ],
            out_specs=pl.BlockSpec((b_tile, c_out, s_flat), lambda i: (i, 0, 0)),
            scratch_shapes=[
                pltpu.VMEM((b_tile, c_in, hp, wp), jnp.float32),   # in-kernel padded activations
                pltpu.VMEM((c_in_mat, s_flat), jnp.float32),       # lane-dense depthwise slab
            ],
        ),
        compiler_params=pltpu.CompilerParams(
            dimension_semantics=("parallel",),
            vmem_limit_bytes=vmem_limit,
        ),
    )(x, wdw_flat, wpw_arg, b_eff)

    # free (metadata-only) reshape back to NCHW
    return out_flat.reshape(n, c_out, h_out, w_out)


def _reference(x, w_dw, b_dw, w_pw, b_pw, stride, padding):
    """Pure-JAX reference: depthwise conv + bias, then 1x1 conv + bias (true f32)."""
    c_in = x.shape[1]
    hi = jax.lax.Precision.HIGHEST
    y = jax.lax.conv_general_dilated(
        x, w_dw, window_strides=(stride, stride),
        padding=[(padding, padding), (padding, padding)],
        dimension_numbers=("NCHW", "OIHW", "NCHW"),
        feature_group_count=c_in, precision=hi)
    y = y + b_dw.reshape(1, c_in, 1, 1)
    z = jax.lax.conv_general_dilated(
        y, w_pw, window_strides=(1, 1), padding=[(0, 0), (0, 0)],
        dimension_numbers=("NCHW", "OIHW", "NCHW"), precision=hi)
    return z + b_pw.reshape(1, -1, 1, 1)


if __name__ == "__main__":
    def run_case(n, c_in, c_out, hw, k, stride, padding, tol, integer_data=False):
        key = jax.random.PRNGKey(0)
        k1, k2, k3, k4, k5 = jax.random.split(key, 5)
        if integer_data:
            # Small-integer data is exactly representable at every MXU pass precision,
            # so MXU-path cases compare exactly against the f32 reference.
            x = jax.random.randint(k1, (n, c_in, hw, hw), -3, 4).astype(jnp.float32)
            w_dw = jax.random.randint(k2, (c_in, 1, k, k), -2, 3).astype(jnp.float32)
            b_dw = jax.random.randint(k3, (c_in,), -3, 4).astype(jnp.float32)
            w_pw = jax.random.randint(k4, (c_out, c_in, 1, 1), -2, 3).astype(jnp.float32)
            b_pw = jax.random.randint(k5, (c_out,), -3, 4).astype(jnp.float32)
        else:
            x = jax.random.normal(k1, (n, c_in, hw, hw), dtype=jnp.float32)
            w_dw = jax.random.normal(k2, (c_in, 1, k, k), dtype=jnp.float32) * (1.0 / k)
            b_dw = jax.random.normal(k3, (c_in,), dtype=jnp.float32)
            w_pw = jax.random.normal(k4, (c_out, c_in, 1, 1), dtype=jnp.float32) * 0.5
            b_pw = jax.random.normal(k5, (c_out,), dtype=jnp.float32)

        out = dconv2d(x, w_dw, b_dw, w_pw, b_pw, stride=stride, padding=padding)
        out = jax.block_until_ready(out)
        ref = _reference(x, w_dw, b_dw, w_pw, b_pw, stride, padding)
        assert out.shape == ref.shape, (out.shape, ref.shape)
        assert out.dtype == x.dtype
        err = float(jnp.max(jnp.abs(out - ref)))
        assert err <= tol, (dict(n=n, c_in=c_in, c_out=c_out, hw=hw, k=k,
                                 stride=stride, padding=padding), err)

    # Primary case ("same" 3x3 depthwise + expanding 1x1): exact-f32 VPU pointwise path.
    run_case(n=2, c_in=4, c_out=8, hw=16, k=3, stride=1, padding=1, tol=1e-4)
    # In-kernel stride: strided output size, on-chip W decimation, no post-hoc slicing.
    run_case(n=2, c_in=4, c_out=8, hw=16, k=3, stride=2, padding=1, tol=1e-5,
             integer_data=True)
    # MXU pointwise path (c_in*c_out >= 64), padding=0, batch=1.
    run_case(n=1, c_in=8, c_out=16, hw=16, k=3, stride=1, padding=0, tol=1e-5,
             integer_data=True)

    print("KERNEL_OK")
</pallas_src>

<mosaic_0001>
module attributes {stable_mosaic.version = 11 : i64} {
  func.func @kernel(%arg0: i32, %arg1: memref<1x4x16x16xf32, #tpu.memory_space<vmem>>, %arg2: memref<36xf32, #tpu.memory_space<smem>>, %arg3: memref<32xf32, #tpu.memory_space<smem>>, %arg4: memref<8x1xf32, #tpu.memory_space<vmem>>, %arg5: memref<1x8x256xf32, #tpu.memory_space<vmem>>, %arg6: memref<1x4x18x18xf32, #tpu.memory_space<vmem>>, %arg7: memref<4x256xf32, #tpu.memory_space<vmem>>) attributes {dimension_semantics = [#tpu.dimension_semantics<parallel>], iteration_bounds = array<i64: 2>, scalar_prefetch = 0 : i64, scratch_operands = 2 : i64, tpu.core_type = #tpu.core_type<tc>, window_params = [{transform_indices = @transform_0, window_bounds = array<i64: 1, 4, 16, 16>}, {transform_indices = @transform_1, window_bounds = array<i64: 36>}, {transform_indices = @transform_2, window_bounds = array<i64: 32>}, {pipeline_mode = #tpu.pipeline_mode<synchronous>, transform_indices = @transform_3, window_bounds = array<i64: 8, 1>}, {transform_indices = @transform_4, window_bounds = array<i64: 1, 8, 256>}]} {
    %cst = arith.constant 0.000000e+00 : f32
    %0 = vector.broadcast %cst : f32 to vector<1x4x1x18xf32>
    %c0 = arith.constant 0 : index
    %c0_0 = arith.constant 0 : index
    %c0_1 = arith.constant 0 : index
    %c0_2 = arith.constant 0 : index
    %1 = vector.load %arg6[%c0, %c0_0, %c0_1, %c0_2] : memref<1x4x18x18xf32, #tpu.memory_space<vmem>>, vector<1x4x1x18xf32>
    tpu.vector_store %arg6[%c0, %c0_0, %c0_1, %c0_2], %0 {strides = array<i32>} : memref<1x4x18x18xf32, #tpu.memory_space<vmem>>, vector<1x4x1x18xf32>,
    %c0_3 = arith.constant 0 : index
    %c0_4 = arith.constant 0 : index
    %c17 = arith.constant 17 : index
    %c0_5 = arith.constant 0 : index
    %2 = vector.load %arg6[%c0_3, %c0_4, %c17, %c0_5] : memref<1x4x18x18xf32, #tpu.memory_space<vmem>>, vector<1x4x1x18xf32>
    tpu.vector_store %arg6[%c0_3, %c0_4, %c17, %c0_5], %0 {strides = array<i32>} : memref<1x4x18x18xf32, #tpu.memory_space<vmem>>, vector<1x4x1x18xf32>,
    %cst_6 = arith.constant 0.000000e+00 : f32
    %3 = vector.broadcast %cst_6 : f32 to vector<1x4x18x1xf32>
    %c0_7 = arith.constant 0 : index
    %c0_8 = arith.constant 0 : index
    %c0_9 = arith.constant 0 : index
    %c0_10 = arith.constant 0 : index
    %4 = vector.load %arg6[%c0_7, %c0_8, %c0_9, %c0_10] : memref<1x4x18x18xf32, #tpu.memory_space<vmem>>, vector<1x4x18x1xf32>
    tpu.vector_store %arg6[%c0_7, %c0_8, %c0_9, %c0_10], %3 {strides = array<i32>} : memref<1x4x18x18xf32, #tpu.memory_space<vmem>>, vector<1x4x18x1xf32>,
    %c0_11 = arith.constant 0 : index
    %c0_12 = arith.constant 0 : index
    %c0_13 = arith.constant 0 : index
    %c17_14 = arith.constant 17 : index
    %5 = vector.load %arg6[%c0_11, %c0_12, %c0_13, %c17_14] : memref<1x4x18x18xf32, #tpu.memory_space<vmem>>, vector<1x4x18x1xf32>
    tpu.vector_store %arg6[%c0_11, %c0_12, %c0_13, %c17_14], %3 {strides = array<i32>} : memref<1x4x18x18xf32, #tpu.memory_space<vmem>>, vector<1x4x18x1xf32>,
    %c0_15 = arith.constant 0 : index
    %c0_16 = arith.constant 0 : index
    %c0_17 = arith.constant 0 : index
    %c0_18 = arith.constant 0 : index
    %6 = vector.load %arg1[%c0_15, %c0_16, %c0_17, %c0_18] : memref<1x4x16x16xf32, #tpu.memory_space<vmem>>, vector<1x4x16x16xf32>
    %c0_19 = arith.constant 0 : index
    %c0_20 = arith.constant 0 : index
    %c1 = arith.constant 1 : index
    %c1_21 = arith.constant 1 : index
    %7 = vector.load %arg6[%c0_19, %c0_20, %c1, %c1_21] : memref<1x4x18x18xf32, #tpu.memory_space<vmem>>, vector<1x4x16x16xf32>
    tpu.vector_store %arg6[%c0_19, %c0_20, %c1, %c1_21], %6 {strides = array<i32>} : memref<1x4x18x18xf32, #tpu.memory_space<vmem>>, vector<1x4x16x16xf32>,
    %c0_22 = arith.constant 0 : index
    %8 = memref.load %arg2[%c0_22] : memref<36xf32, #tpu.memory_space<smem>>
    %c1_23 = arith.constant 1 : index
    %9 = memref.load %arg2[%c1_23] : memref<36xf32, #tpu.memory_space<smem>>
    %c2 = arith.constant 2 : index
    %10 = memref.load %arg2[%c2] : memref<36xf32, #tpu.memory_space<smem>>
    %c3 = arith.constant 3 : index
    %11 = memref.load %arg2[%c3] : memref<36xf32, #tpu.memory_space<smem>>
    %c4 = arith.constant 4 : index
    %12 = memref.load %arg2[%c4] : memref<36xf32, #tpu.memory_space<smem>>
    %c5 = arith.constant 5 : index
    %13 = memref.load %arg2[%c5] : memref<36xf32, #tpu.memory_space<smem>>
    %c6 = arith.constant 6 : index
    %14 = memref.load %arg2[%c6] : memref<36xf32, #tpu.memory_space<smem>>
    %c7 = arith.constant 7 : index
    %15 = memref.load %arg2[%c7] : memref<36xf32, #tpu.memory_space<smem>>
    %c8 = arith.constant 8 : index
    %16 = memref.load %arg2[%c8] : memref<36xf32, #tpu.memory_space<smem>>
    %cst_24 = arith.constant 0.000000e+00 : f32
    %17 = vector.broadcast %cst_24 : f32 to vector<16x16xf32>
    %c0_25 = arith.constant 0 : index
    %c0_26 = arith.constant 0 : index
    %c0_27 = arith.constant 0 : index
    %c0_28 = arith.constant 0 : index
    %18 = vector.load %arg6[%c0_25, %c0_26, %c0_27, %c0_28] : memref<1x4x18x18xf32, #tpu.memory_space<vmem>>, vector<1x1x16x18xf32>
    %19 = vector.shape_cast %18 : vector<1x1x16x18xf32> to vector<16x18xf32>
    %20 = vector.extract_strided_slice %19 {offsets = [0, 0], sizes = [16, 16], strides = [1, 1]} : vector<16x18xf32> to vector<16x16xf32>
    %21 = vector.broadcast %8 : f32 to vector<16x16xf32>
    %22 = arith.mulf %20, %21 : vector<16x16xf32>
    %23 = arith.addf %17, %22 : vector<16x16xf32>
    %24 = vector.extract_strided_slice %19 {offsets = [0, 1], sizes = [16, 16], strides = [1, 1]} : vector<16x18xf32> to vector<16x16xf32>
    %25 = vector.broadcast %9 : f32 to vector<16x16xf32>
    %26 = arith.mulf %24, %25 : vector<16x16xf32>
    %27 = arith.addf %23, %26 : vector<16x16xf32>
    %28 = vector.extract_strided_slice %19 {offsets = [0, 2], sizes = [16, 16], strides = [1, 1]} : vector<16x18xf32> to vector<16x16xf32>
    %29 = vector.broadcast %10 : f32 to vector<16x16xf32>
    %30 = arith.mulf %28, %29 : vector<16x16xf32>
    %31 = arith.addf %27, %30 : vector<16x16xf32>
    %c0_29 = arith.constant 0 : index
    %c0_30 = arith.constant 0 : index
    %c1_31 = arith.constant 1 : index
    %c0_32 = arith.constant 0 : index
    %32 = vector.load %arg6[%c0_29, %c0_30, %c1_31, %c0_32] : memref<1x4x18x18xf32, #tpu.memory_space<vmem>>, vector<1x1x16x18xf32>
    %33 = vector.shape_cast %32 : vector<1x1x16x18xf32> to vector<16x18xf32>
    %34 = vector.extract_strided_slice %33 {offsets = [0, 0], sizes = [16, 16], strides = [1, 1]} : vector<16x18xf32> to vector<16x16xf32>
    %35 = vector.broadcast %11 : f32 to vector<16x16xf32>
    %36 = arith.mulf %34, %35 : vector<16x16xf32>
    %37 = arith.addf %31, %36 : vector<16x16xf32>
    %38 = vector.extract_strided_slice %33 {offsets = [0, 1], sizes = [16, 16], strides = [1, 1]} : vector<16x18xf32> to vector<16x16xf32>
    %39 = vector.broadcast %12 : f32 to vector<16x16xf32>
    %40 = arith.mulf %38, %39 : vector<16x16xf32>
    %41 = arith.addf %37, %40 : vector<16x16xf32>
    %42 = vector.extract_strided_slice %33 {offsets = [0, 2], sizes = [16, 16], strides = [1, 1]} : vector<16x18xf32> to vector<16x16xf32>
    %43 = vector.broadcast %13 : f32 to vector<16x16xf32>
    %44 = arith.mulf %42, %43 : vector<16x16xf32>
    %45 = arith.addf %41, %44 : vector<16x16xf32>
    %c0_33 = arith.constant 0 : index
    %c0_34 = arith.constant 0 : index
    %c2_35 = arith.constant 2 : index
    %c0_36 = arith.constant 0 : index
    %46 = vector.load %arg6[%c0_33, %c0_34, %c2_35, %c0_36] : memref<1x4x18x18xf32, #tpu.memory_space<vmem>>, vector<1x1x16x18xf32>
    %47 = vector.shape_cast %46 : vector<1x1x16x18xf32> to vector<16x18xf32>
    %48 = vector.extract_strided_slice %47 {offsets = [0, 0], sizes = [16, 16], strides = [1, 1]} : vector<16x18xf32> to vector<16x16xf32>
    %49 = vector.broadcast %14 : f32 to vector<16x16xf32>
    %50 = arith.mulf %48, %49 : vector<16x16xf32>
    %51 = arith.addf %45, %50 : vector<16x16xf32>
    %52 = vector.extract_strided_slice %47 {offsets = [0, 1], sizes = [16, 16], strides = [1, 1]} : vector<16x18xf32> to vector<16x16xf32>
    %53 = vector.broadcast %15 : f32 to vector<16x16xf32>
    %54 = arith.mulf %52, %53 : vector<16x16xf32>
    %55 = arith.addf %51, %54 : vector<16x16xf32>
    %56 = vector.extract_strided_slice %47 {offsets = [0, 2], sizes = [16, 16], strides = [1, 1]} : vector<16x18xf32> to vector<16x16xf32>
    %57 = vector.broadcast %16 : f32 to vector<16x16xf32>
    %58 = arith.mulf %56, %57 : vector<16x16xf32>
    %59 = arith.addf %55, %58 : vector<16x16xf32>
    %60 = vector.extract_strided_slice %59 {offsets = [0, 0], sizes = [1, 16], strides = [1, 1]} : vector<16x16xf32> to vector<1x16xf32>
    %c0_37 = arith.constant 0 : index
    %c0_38 = arith.constant 0 : index
    %61 = vector.load %arg7[%c0_37, %c0_38] : memref<4x256xf32, #tpu.memory_space<vmem>>, vector<1x16xf32>
    tpu.vector_store %arg7[%c0_37, %c0_38], %60 {strides = array<i32>} : memref<4x256xf32, #tpu.memory_space<vmem>>, vector<1x16xf32>,
    %62 = vector.extract_strided_slice %59 {offsets = [1, 0], sizes = [1, 16], strides = [1, 1]} : vector<16x16xf32> to vector<1x16xf32>
    %c0_39 = arith.constant 0 : index
    %c16 = arith.constant 16 : index
    %63 = vector.load %arg7[%c0_39, %c16] : memref<4x256xf32, #tpu.memory_space<vmem>>, vector<1x16xf32>
    tpu.vector_store %arg7[%c0_39, %c16], %62 {strides = array<i32>} : memref<4x256xf32, #tpu.memory_space<vmem>>, vector<1x16xf32>,
    %64 = vector.extract_strided_slice %59 {offsets = [2, 0], sizes = [1, 16], strides = [1, 1]} : vector<16x16xf32> to vector<1x16xf32>
    %c0_40 = arith.constant 0 : index
    %c32 = arith.constant 32 : index
    %65 = vector.load %arg7[%c0_40, %c32] : memref<4x256xf32, #tpu.memory_space<vmem>>, vector<1x16xf32>
    tpu.vector_store %arg7[%c0_40, %c32], %64 {strides = array<i32>} : memref<4x256xf32, #tpu.memory_space<vmem>>, vector<1x16xf32>,
    %66 = vector.extract_strided_slice %59 {offsets = [3, 0], sizes = [1, 16], strides = [1, 1]} : vector<16x16xf32> to vector<1x16xf32>
    %c0_41 = arith.constant 0 : index
    %c48 = arith.constant 48 : index
    %67 = vector.load %arg7[%c0_41, %c48] : memref<4x256xf32, #tpu.memory_space<vmem>>, vector<1x16xf32>
    tpu.vector_store %arg7[%c0_41, %c48], %66 {strides = array<i32>} : memref<4x256xf32, #tpu.memory_space<vmem>>, vector<1x16xf32>,
    %68 = vector.extract_strided_slice %59 {offsets = [4, 0], sizes = [1, 16], strides = [1, 1]} : vector<16x16xf32> to vector<1x16xf32>
    %c0_42 = arith.constant 0 : index
    %c64 = arith.constant 64 : index
    %69 = vector.load %arg7[%c0_42, %c64] : memref<4x256xf32, #tpu.memory_space<vmem>>, vector<1x16xf32>
    tpu.vector_store %arg7[%c0_42, %c64], %68 {strides = array<i32>} : memref<4x256xf32, #tpu.memory_space<vmem>>, vector<1x16xf32>,
    %70 = vector.extract_strided_slice %59 {offsets = [5, 0], sizes = [1, 16], strides = [1, 1]} : vector<16x16xf32> to vector<1x16xf32>
    %c0_43 = arith.constant 0 : index
    %c80 = arith.constant 80 : index
    %71 = vector.load %arg7[%c0_43, %c80] : memref<4x256xf32, #tpu.memory_space<vmem>>, vector<1x16xf32>
    tpu.vector_store %arg7[%c0_43, %c80], %70 {strides = array<i32>} : memref<4x256xf32, #tpu.memory_space<vmem>>, vector<1x16xf32>,
    %72 = vector.extract_strided_slice %59 {offsets = [6, 0], sizes = [1, 16], strides = [1, 1]} : vector<16x16xf32> to vector<1x16xf32>
    %c0_44 = arith.constant 0 : index
    %c96 = arith.constant 96 : index
    %73 = vector.load %arg7[%c0_44, %c96] : memref<4x256xf32, #tpu.memory_space<vmem>>, vector<1x16xf32>
    tpu.vector_store %arg7[%c0_44, %c96], %72 {strides = array<i32>} : memref<4x256xf32, #tpu.memory_space<vmem>>, vector<1x16xf32>,
    %74 = vector.extract_strided_slice %59 {offsets = [7, 0], sizes = [1, 16], strides = [1, 1]} : vector<16x16xf32> to vector<1x16xf32>
    %c0_45 = arith.constant 0 : index
    %c112 = arith.constant 112 : index
    %75 = vector.load %arg7[%c0_45, %c112] : memref<4x256xf32, #tpu.memory_space<vmem>>, vector<1x16xf32>
    tpu.vector_store %arg7[%c0_45, %c112], %74 {strides = array<i32>} : memref<4x256xf32, #tpu.memory_space<vmem>>, vector<1x16xf32>,
    %76 = vector.extract_strided_slice %59 {offsets = [8, 0], sizes = [1, 16], strides = [1, 1]} : vector<16x16xf32> to vector<1x16xf32>
    %c0_46 = arith.constant 0 : index
    %c128 = arith.constant 128 : index
    %77 = vector.load %arg7[%c0_46, %c128] : memref<4x256xf32, #tpu.memory_space<vmem>>, vector<1x16xf32>
    tpu.vector_store %arg7[%c0_46, %c128], %76 {strides = array<i32>} : memref<4x256xf32, #tpu.memory_space<vmem>>, vector<1x16xf32>,
    %78 = vector.extract_strided_slice %59 {offsets = [9, 0], sizes = [1, 16], strides = [1, 1]} : vector<16x16xf32> to vector<1x16xf32>
    %c0_47 = arith.constant 0 : index
    %c144 = arith.constant 144 : index
    %79 = vector.load %arg7[%c0_47, %c144] : memref<4x256xf32, #tpu.memory_space<vmem>>, vector<1x16xf32>
    tpu.vector_store %arg7[%c0_47, %c144], %78 {strides = array<i32>} : memref<4x256xf32, #tpu.memory_space<vmem>>, vector<1x16xf32>,
    %80 = vector.extract_strided_slice %59 {offsets = [10, 0], sizes = [1, 16], strides = [1, 1]} : vector<16x16xf32> to vector<1x16xf32>
    %c0_48 = arith.constant 0 : index
    %c160 = arith.constant 160 : index
    %81 = vector.load %arg7[%c0_48, %c160] : memref<4x256xf32, #tpu.memory_space<vmem>>, vector<1x16xf32>
    tpu.vector_store %arg7[%c0_48, %c160], %80 {strides = array<i32>} : memref<4x256xf32, #tpu.memory_space<vmem>>, vector<1x16xf32>,
    %82 = vector.extract_strided_slice %59 {offsets = [11, 0], sizes = [1, 16], strides = [1, 1]} : vector<16x16xf32> to vector<1x16xf32>
    %c0_49 = arith.constant 0 : index
    %c176 = arith.constant 176 : index
    %83 = vector.load %arg7[%c0_49, %c176] : memref<4x256xf32, #tpu.memory_space<vmem>>, vector<1x16xf32>
    tpu.vector_store %arg7[%c0_49, %c176], %82 {strides = array<i32>} : memref<4x256xf32, #tpu.memory_space<vmem>>, vector<1x16xf32>,
    %84 = vector.extract_strided_slice %59 {offsets = [12, 0], sizes = [1, 16], strides = [1, 1]} : vector<16x16xf32> to vector<1x16xf32>
    %c0_50 = arith.constant 0 : index
    %c192 = arith.constant 192 : index
    %85 = vector.load %arg7[%c0_50, %c192] : memref<4x256xf32, #tpu.memory_space<vmem>>, vector<1x16xf32>
    tpu.vector_store %arg7[%c0_50, %c192], %84 {strides = array<i32>} : memref<4x256xf32, #tpu.memory_space<vmem>>, vector<1x16xf32>,
    %86 = vector.extract_strided_slice %59 {offsets = [13, 0], sizes = [1, 16], strides = [1, 1]} : vector<16x16xf32> to vector<1x16xf32>
    %c0_51 = arith.constant 0 : index
    %c208 = arith.constant 208 : index
    %87 = vector.load %arg7[%c0_51, %c208] : memref<4x256xf32, #tpu.memory_space<vmem>>, vector<1x16xf32>
    tpu.vector_store %arg7[%c0_51, %c208], %86 {strides = array<i32>} : memref<4x256xf32, #tpu.memory_space<vmem>>, vector<1x16xf32>,
    %88 = vector.extract_strided_slice %59 {offsets = [14, 0], sizes = [1, 16], strides = [1, 1]} : vector<16x16xf32> to vector<1x16xf32>
    %c0_52 = arith.constant 0 : index
    %c224 = arith.constant 224 : index
    %89 = vector.load %arg7[%c0_52, %c224] : memref<4x256xf32, #tpu.memory_space<vmem>>, vector<1x16xf32>
    tpu.vector_store %arg7[%c0_52, %c224], %88 {strides = array<i32>} : memref<4x256xf32, #tpu.memory_space<vmem>>, vector<1x16xf32>,
    %90 = vector.extract_strided_slice %59 {offsets = [15, 0], sizes = [1, 16], strides = [1, 1]} : vector<16x16xf32> to vector<1x16xf32>
    %c0_53 = arith.constant 0 : index
    %c240 = arith.constant 240 : index
    %91 = vector.load %arg7[%c0_53, %c240] : memref<4x256xf32, #tpu.memory_space<vmem>>, vector<1x16xf32>
    tpu.vector_store %arg7[%c0_53, %c240], %90 {strides = array<i32>} : memref<4x256xf32, #tpu.memory_space<vmem>>, vector<1x16xf32>,
    %c9 = arith.constant 9 : index
    %92 = memref.load %arg2[%c9] : memref<36xf32, #tpu.memory_space<smem>>
    %c10 = arith.constant 10 : index
    %93 = memref.load %arg2[%c10] : memref<36xf32, #tpu.memory_space<smem>>
    %c11 = arith.constant 11 : index
    %94 = memref.load %arg2[%c11] : memref<36xf32, #tpu.memory_space<smem>>
    %c12 = arith.constant 12 : index
    %95 = memref.load %arg2[%c12] : memref<36xf32, #tpu.memory_space<smem>>
    %c13 = arith.constant 13 : index
    %96 = memref.load %arg2[%c13] : memref<36xf32, #tpu.memory_space<smem>>
    %c14 = arith.constant 14 : index
    %97 = memref.load %arg2[%c14] : memref<36xf32, #tpu.memory_space<smem>>
    %c15 = arith.constant 15 : index
    %98 = memref.load %arg2[%c15] : memref<36xf32, #tpu.memory_space<smem>>
    %c16_54 = arith.constant 16 : index
    %99 = memref.load %arg2[%c16_54] : memref<36xf32, #tpu.memory_space<smem>>
    %c17_55 = arith.constant 17 : index
    %100 = memref.load %arg2[%c17_55] : memref<36xf32, #tpu.memory_space<smem>>
    %cst_56 = arith.constant 0.000000e+00 : f32
    %101 = vector.broadcast %cst_56 : f32 to vector<16x16xf32>
    %c0_57 = arith.constant 0 : index
    %c1_58 = arith.constant 1 : index
    %c0_59 = arith.constant 0 : index
    %c0_60 = arith.constant 0 : index
    %102 = vector.load %arg6[%c0_57, %c1_58, %c0_59, %c0_60] : memref<1x4x18x18xf32, #tpu.memory_space<vmem>>, vector<1x1x16x18xf32>
    %103 = vector.shape_cast %102 : vector<1x1x16x18xf32> to vector<16x18xf32>
    %104 = vector.extract_strided_slice %103 {offsets = [0, 0], sizes = [16, 16], strides = [1, 1]} : vector<16x18xf32> to vector<16x16xf32>
    %105 = vector.broadcast %92 : f32 to vector<16x16xf32>
    %106 = arith.mulf %104, %105 : vector<16x16xf32>
    %107 = arith.addf %101, %106 : vector<16x16xf32>
    %108 = vector.extract_strided_slice %103 {offsets = [0, 1], sizes = [16, 16], strides = [1, 1]} : vector<16x18xf32> to vector<16x16xf32>
    %109 = vector.broadcast %93 : f32 to vector<16x16xf32>
    %110 = arith.mulf %108, %109 : vector<16x16xf32>
    %111 = arith.addf %107, %110 : vector<16x16xf32>
    %112 = vector.extract_strided_slice %103 {offsets = [0, 2], sizes = [16, 16], strides = [1, 1]} : vector<16x18xf32> to vector<16x16xf32>
    %113 = vector.broadcast %94 : f32 to vector<16x16xf32>
    %114 = arith.mulf %112, %113 : vector<16x16xf32>
    %115 = arith.addf %111, %114 : vector<16x16xf32>
    %c0_61 = arith.constant 0 : index
    %c1_62 = arith.constant 1 : index
    %c1_63 = arith.constant 1 : index
    %c0_64 = arith.constant 0 : index
    %116 = vector.load %arg6[%c0_61, %c1_62, %c1_63, %c0_64] : memref<1x4x18x18xf32, #tpu.memory_space<vmem>>, vector<1x1x16x18xf32>
    %117 = vector.shape_cast %116 : vector<1x1x16x18xf32> to vector<16x18xf32>
    %118 = vector.extract_strided_slice %117 {offsets = [0, 0], sizes = [16, 16], strides = [1, 1]} : vector<16x18xf32> to vector<16x16xf32>
    %119 = vector.broadcast %95 : f32 to vector<16x16xf32>
    %120 = arith.mulf %118, %119 : vector<16x16xf32>
    %121 = arith.addf %115, %120 : vector<16x16xf32>
    %122 = vector.extract_strided_slice %117 {offsets = [0, 1], sizes = [16, 16], strides = [1, 1]} : vector<16x18xf32> to vector<16x16xf32>
    %123 = vector.broadcast %96 : f32 to vector<16x16xf32>
    %124 = arith.mulf %122, %123 : vector<16x16xf32>
    %125 = arith.addf %121, %124 : vector<16x16xf32>
    %126 = vector.extract_strided_slice %117 {offsets = [0, 2], sizes = [16, 16], strides = [1, 1]} : vector<16x18xf32> to vector<16x16xf32>
    %127 = vector.broadcast %97 : f32 to vector<16x16xf32>
    %128 = arith.mulf %126, %127 : vector<16x16xf32>
    %129 = arith.addf %125, %128 : vector<16x16xf32>
    %c0_65 = arith.constant 0 : index
    %c1_66 = arith.constant 1 : index
    %c2_67 = arith.constant 2 : index
    %c0_68 = arith.constant 0 : index
    %130 = vector.load %arg6[%c0_65, %c1_66, %c2_67, %c0_68] : memref<1x4x18x18xf32, #tpu.memory_space<vmem>>, vector<1x1x16x18xf32>
    %131 = vector.shape_cast %130 : vector<1x1x16x18xf32> to vector<16x18xf32>
    %132 = vector.extract_strided_slice %131 {offsets = [0, 0], sizes = [16, 16], strides = [1, 1]} : vector<16x18xf32> to vector<16x16xf32>
    %133 = vector.broadcast %98 : f32 to vector<16x16xf32>
    %134 = arith.mulf %132, %133 : vector<16x16xf32>
    %135 = arith.addf %129, %134 : vector<16x16xf32>
    %136 = vector.extract_strided_slice %131 {offsets = [0, 1], sizes = [16, 16], strides = [1, 1]} : vector<16x18xf32> to vector<16x16xf32>
    %137 = vector.broadcast %99 : f32 to vector<16x16xf32>
    %138 = arith.mulf %136, %137 : vector<16x16xf32>
    %139 = arith.addf %135, %138 : vector<16x16xf32>
    %140 = vector.extract_strided_slice %131 {offsets = [0, 2], sizes = [16, 16], strides = [1, 1]} : vector<16x18xf32> to vector<16x16xf32>
    %141 = vector.broadcast %100 : f32 to vector<16x16xf32>
    %142 = arith.mulf %140, %141 : vector<16x16xf32>
    %143 = arith.addf %139, %142 : vector<16x16xf32>
    %144 = vector.extract_strided_slice %143 {offsets = [0, 0], sizes = [1, 16], strides = [1, 1]} : vector<16x16xf32> to vector<1x16xf32>
    %c1_69 = arith.constant 1 : index
    %c0_70 = arith.constant 0 : index
    %145 = vector.load %arg7[%c1_69, %c0_70] : memref<4x256xf32, #tpu.memory_space<vmem>>, vector<1x16xf32>
    tpu.vector_store %arg7[%c1_69, %c0_70], %144 {strides = array<i32>} : memref<4x256xf32, #tpu.memory_space<vmem>>, vector<1x16xf32>,
    %146 = vector.extract_strided_slice %143 {offsets = [1, 0], sizes = [1, 16], strides = [1, 1]} : vector<16x16xf32> to vector<1x16xf32>
    %c1_71 = arith.constant 1 : index
    %c16_72 = arith.constant 16 : index
    %147 = vector.load %arg7[%c1_71, %c16_72] : memref<4x256xf32, #tpu.memory_space<vmem>>, vector<1x16xf32>
    tpu.vector_store %arg7[%c1_71, %c16_72], %146 {strides = array<i32>} : memref<4x256xf32, #tpu.memory_space<vmem>>, vector<1x16xf32>,
    %148 = vector.extract_strided_slice %143 {offsets = [2, 0], sizes = [1, 16], strides = [1, 1]} : vector<16x16xf32> to vector<1x16xf32>
    %c1_73 = arith.constant 1 : index
    %c32_74 = arith.constant 32 : index
    %149 = vector.load %arg7[%c1_73, %c32_74] : memref<4x256xf32, #tpu.memory_space<vmem>>, vector<1x16xf32>
    tpu.vector_store %arg7[%c1_73, %c32_74], %148 {strides = array<i32>} : memref<4x256xf32, #tpu.memory_space<vmem>>, vector<1x16xf32>,
    %150 = vector.extract_strided_slice %143 {offsets = [3, 0], sizes = [1, 16], strides = [1, 1]} : vector<16x16xf32> to vector<1x16xf32>
    %c1_75 = arith.constant 1 : index
    %c48_76 = arith.constant 48 : index
    %151 = vector.load %arg7[%c1_75, %c48_76] : memref<4x256xf32, #tpu.memory_space<vmem>>, vector<1x16xf32>
    tpu.vector_store %arg7[%c1_75, %c48_76], %150 {strides = array<i32>} : memref<4x256xf32, #tpu.memory_space<vmem>>, vector<1x16xf32>,
    %152 = vector.extract_strided_slice %143 {offsets = [4, 0], sizes = [1, 16], strides = [1, 1]} : vector<16x16xf32> to vector<1x16xf32>
    %c1_77 = arith.constant 1 : index
    %c64_78 = arith.constant 64 : index
    %153 = vector.load %arg7[%c1_77, %c64_78] : memref<4x256xf32, #tpu.memory_space<vmem>>, vector<1x16xf32>
    tpu.vector_store %arg7[%c1_77, %c64_78], %152 {strides = array<i32>} : memref<4x256xf32, #tpu.memory_space<vmem>>, vector<1x16xf32>,
    %154 = vector.extract_strided_slice %143 {offsets = [5, 0], sizes = [1, 16], strides = [1, 1]} : vector<16x16xf32> to vector<1x16xf32>
    %c1_79 = arith.constant 1 : index
    %c80_80 = arith.constant 80 : index
    %155 = vector.load %arg7[%c1_79, %c80_80] : memref<4x256xf32, #tpu.memory_space<vmem>>, vector<1x16xf32>
    tpu.vector_store %arg7[%c1_79, %c80_80], %154 {strides = array<i32>} : memref<4x256xf32, #tpu.memory_space<vmem>>, vector<1x16xf32>,
    %156 = vector.extract_strided_slice %143 {offsets = [6, 0], sizes = [1, 16], strides = [1, 1]} : vector<16x16xf32> to vector<1x16xf32>
    %c1_81 = arith.constant 1 : index
    %c96_82 = arith.constant 96 : index
    %157 = vector.load %arg7[%c1_81, %c96_82] : memref<4x256xf32, #tpu.memory_space<vmem>>, vector<1x16xf32>
    tpu.vector_store %arg7[%c1_81, %c96_82], %156 {strides = array<i32>} : memref<4x256xf32, #tpu.memory_space<vmem>>, vector<1x16xf32>,
    %158 = vector.extract_strided_slice %143 {offsets = [7, 0], sizes = [1, 16], strides = [1, 1]} : vector<16x16xf32> to vector<1x16xf32>
    %c1_83 = arith.constant 1 : index
    %c112_84 = arith.constant 112 : index
    %159 = vector.load %arg7[%c1_83, %c112_84] : memref<4x256xf32, #tpu.memory_space<vmem>>, vector<1x16xf32>
    tpu.vector_store %arg7[%c1_83, %c112_84], %158 {strides = array<i32>} : memref<4x256xf32, #tpu.memory_space<vmem>>, vector<1x16xf32>,
    %160 = vector.extract_strided_slice %143 {offsets = [8, 0], sizes = [1, 16], strides = [1, 1]} : vector<16x16xf32> to vector<1x16xf32>
    %c1_85 = arith.constant 1 : index
    %c128_86 = arith.constant 128 : index
    %161 = vector.load %arg7[%c1_85, %c128_86] : memref<4x256xf32, #tpu.memory_space<vmem>>, vector<1x16xf32>
    tpu.vector_store %arg7[%c1_85, %c128_86], %160 {strides = array<i32>} : memref<4x256xf32, #tpu.memory_space<vmem>>, vector<1x16xf32>,
    %162 = vector.extract_strided_slice %143 {offsets = [9, 0], sizes = [1, 16], strides = [1, 1]} : vector<16x16xf32> to vector<1x16xf32>
    %c1_87 = arith.constant 1 : index
    %c144_88 = arith.constant 144 : index
    %163 = vector.load %arg7[%c1_87, %c144_88] : memref<4x256xf32, #tpu.memory_space<vmem>>, vector<1x16xf32>
    tpu.vector_store %arg7[%c1_87, %c144_88], %162 {strides = array<i32>} : memref<4x256xf32, #tpu.memory_space<vmem>>, vector<1x16xf32>,
    %164 = vector.extract_strided_slice %143 {offsets = [10, 0], sizes = [1, 16], strides = [1, 1]} : vector<16x16xf32> to vector<1x16xf32>
    %c1_89 = arith.constant 1 : index
    %c160_90 = arith.constant 160 : index
    %165 = vector.load %arg7[%c1_89, %c160_90] : memref<4x256xf32, #tpu.memory_space<vmem>>, vector<1x16xf32>
    tpu.vector_store %arg7[%c1_89, %c160_90], %164 {strides = array<i32>} : memref<4x256xf32, #tpu.memory_space<vmem>>, vector<1x16xf32>,
    %166 = vector.extract_strided_slice %143 {offsets = [11, 0], sizes = [1, 16], strides = [1, 1]} : vector<16x16xf32> to vector<1x16xf32>
    %c1_91 = arith.constant 1 : index
    %c176_92 = arith.constant 176 : index
    %167 = vector.load %arg7[%c1_91, %c176_92] : memref<4x256xf32, #tpu.memory_space<vmem>>, vector<1x16xf32>
    tpu.vector_store %arg7[%c1_91, %c176_92], %166 {strides = array<i32>} : memref<4x256xf32, #tpu.memory_space<vmem>>, vector<1x16xf32>,
    %168 = vector.extract_strided_slice %143 {offsets = [12, 0], sizes = [1, 16], strides = [1, 1]} : vector<16x16xf32> to vector<1x16xf32>
    %c1_93 = arith.constant 1 : index
    %c192_94 = arith.constant 192 : index
    %169 = vector.load %arg7[%c1_93, %c192_94] : memref<4x256xf32, #tpu.memory_space<vmem>>, vector<1x16xf32>
    tpu.vector_store %arg7[%c1_93, %c192_94], %168 {strides = array<i32>} : memref<4x256xf32, #tpu.memory_space<vmem>>, vector<1x16xf32>,
    %170 = vector.extract_strided_slice %143 {offsets = [13, 0], sizes = [1, 16], strides = [1, 1]} : vector<16x16xf32> to vector<1x16xf32>
    %c1_95 = arith.constant 1 : index
    %c208_96 = arith.constant 208 : index
    %171 = vector.load %arg7[%c1_95, %c208_96] : memref<4x256xf32, #tpu.memory_space<vmem>>, vector<1x16xf32>
    tpu.vector_store %arg7[%c1_95, %c208_96], %170 {strides = array<i32>} : memref<4x256xf32, #tpu.memory_space<vmem>>, vector<1x16xf32>,
    %172 = vector.extract_strided_slice %143 {offsets = [14, 0], sizes = [1, 16], strides = [1, 1]} : vector<16x16xf32> to vector<1x16xf32>
    %c1_97 = arith.constant 1 : index
    %c224_98 = arith.constant 224 : index
    %173 = vector.load %arg7[%c1_97, %c224_98] : memref<4x256xf32, #tpu.memory_space<vmem>>, vector<1x16xf32>
    tpu.vector_store %arg7[%c1_97, %c224_98], %172 {strides = array<i32>} : memref<4x256xf32, #tpu.memory_space<vmem>>, vector<1x16xf32>,
    %174 = vector.extract_strided_slice %143 {offsets = [15, 0], sizes = [1, 16], strides = [1, 1]} : vector<16x16xf32> to vector<1x16xf32>
    %c1_99 = arith.constant 1 : index
    %c240_100 = arith.constant 240 : index
    %175 = vector.load %arg7[%c1_99, %c240_100] : memref<4x256xf32, #tpu.memory_space<vmem>>, vector<1x16xf32>
    tpu.vector_store %arg7[%c1_99, %c240_100], %174 {strides = array<i32>} : memref<4x256xf32, #tpu.memory_space<vmem>>, vector<1x16xf32>,
    %c18 = arith.constant 18 : index
    %176 = memref.load %arg2[%c18] : memref<36xf32, #tpu.memory_space<smem>>
    %c19 = arith.constant 19 : index
    %177 = memref.load %arg2[%c19] : memref<36xf32, #tpu.memory_space<smem>>
    %c20 = arith.constant 20 : index
    %178 = memref.load %arg2[%c20] : memref<36xf32, #tpu.memory_space<smem>>
    %c21 = arith.constant 21 : index
    %179 = memref.load %arg2[%c21] : memref<36xf32, #tpu.memory_space<smem>>
    %c22 = arith.constant 22 : index
    %180 = memref.load %arg2[%c22] : memref<36xf32, #tpu.memory_space<smem>>
    %c23 = arith.constant 23 : index
    %181 = memref.load %arg2[%c23] : memref<36xf32, #tpu.memory_space<smem>>
    %c24 = arith.constant 24 : index
    %182 = memref.load %arg2[%c24] : memref<36xf32, #tpu.memory_space<smem>>
    %c25 = arith.constant 25 : index
    %183 = memref.load %arg2[%c25] : memref<36xf32, #tpu.memory_space<smem>>
    %c26 = arith.constant 26 : index
    %184 = memref.load %arg2[%c26] : memref<36xf32, #tpu.memory_space<smem>>
    %cst_101 = arith.constant 0.000000e+00 : f32
    %185 = vector.broadcast %cst_101 : f32 to vector<16x16xf32>
    %c0_102 = arith.constant 0 : index
    %c2_103 = arith.constant 2 : index
    %c0_104 = arith.constant 0 : index
    %c0_105 = arith.constant 0 : index
    %186 = vector.load %arg6[%c0_102, %c2_103, %c0_104, %c0_105] : memref<1x4x18x18xf32, #tpu.memory_space<vmem>>, vector<1x1x16x18xf32>
    %187 = vector.shape_cast %186 : vector<1x1x16x18xf32> to vector<16x18xf32>
    %188 = vector.extract_strided_slice %187 {offsets = [0, 0], sizes = [16, 16], strides = [1, 1]} : vector<16x18xf32> to vector<16x16xf32>
    %189 = vector.broadcast %176 : f32 to vector<16x16xf32>
    %190 = arith.mulf %188, %189 : vector<16x16xf32>
    %191 = arith.addf %185, %190 : vector<16x16xf32>
    %192 = vector.extract_strided_slice %187 {offsets = [0, 1], sizes = [16, 16], strides = [1, 1]} : vector<16x18xf32> to vector<16x16xf32>
    %193 = vector.broadcast %177 : f32 to vector<16x16xf32>
    %194 = arith.mulf %192, %193 : vector<16x16xf32>
    %195 = arith.addf %191, %194 : vector<16x16xf32>
    %196 = vector.extract_strided_slice %187 {offsets = [0, 2], sizes = [16, 16], strides = [1, 1]} : vector<16x18xf32> to vector<16x16xf32>
    %197 = vector.broadcast %178 : f32 to vector<16x16xf32>
    %198 = arith.mulf %196, %197 : vector<16x16xf32>
    %199 = arith.addf %195, %198 : vector<16x16xf32>
    %c0_106 = arith.constant 0 : index
    %c2_107 = arith.constant 2 : index
    %c1_108 = arith.constant 1 : index
    %c0_109 = arith.constant 0 : index
    %200 = vector.load %arg6[%c0_106, %c2_107, %c1_108, %c0_109] : memref<1x4x18x18xf32, #tpu.memory_space<vmem>>, vector<1x1x16x18xf32>
    %201 = vector.shape_cast %200 : vector<1x1x16x18xf32> to vector<16x18xf32>
    %202 = vector.extract_strided_slice %201 {offsets = [0, 0], sizes = [16, 16], strides = [1, 1]} : vector<16x18xf32> to vector<16x16xf32>
    %203 = vector.broadcast %179 : f32 to vector<16x16xf32>
    %204 = arith.mulf %202, %203 : vector<16x16xf32>
    %205 = arith.addf %199, %204 : vector<16x16xf32>
    %206 = vector.extract_strided_slice %201 {offsets = [0, 1], sizes = [16, 16], strides = [1, 1]} : vector<16x18xf32> to vector<16x16xf32>
    %207 = vector.broadcast %180 : f32 to vector<16x16xf32>
    %208 = arith.mulf %206, %207 : vector<16x16xf32>
    %209 = arith.addf %205, %208 : vector<16x16xf32>
    %210 = vector.extract_strided_slice %201 {offsets = [0, 2], sizes = [16, 16], strides = [1, 1]} : vector<16x18xf32> to vector<16x16xf32>
    %211 = vector.broadcast %181 : f32 to vector<16x16xf32>
    %212 = arith.mulf %210, %211 : vector<16x16xf32>
    %213 = arith.addf %209, %212 : vector<16x16xf32>
    %c0_110 = arith.constant 0 : index
    %c2_111 = arith.constant 2 : index
    %c2_112 = arith.constant 2 : index
    %c0_113 = arith.constant 0 : index
    %214 = vector.load %arg6[%c0_110, %c2_111, %c2_112, %c0_113] : memref<1x4x18x18xf32, #tpu.memory_space<vmem>>, vector<1x1x16x18xf32>
    %215 = vector.shape_cast %214 : vector<1x1x16x18xf32> to vector<16x18xf32>
    %216 = vector.extract_strided_slice %215 {offsets = [0, 0], sizes = [16, 16], strides = [1, 1]} : vector<16x18xf32> to vector<16x16xf32>
    %217 = vector.broadcast %182 : f32 to vector<16x16xf32>
    %218 = arith.mulf %216, %217 : vector<16x16xf32>
    %219 = arith.addf %213, %218 : vector<16x16xf32>
    %220 = vector.extract_strided_slice %215 {offsets = [0, 1], sizes = [16, 16], strides = [1, 1]} : vector<16x18xf32> to vector<16x16xf32>
    %221 = vector.broadcast %183 : f32 to vector<16x16xf32>
    %222 = arith.mulf %220, %221 : vector<16x16xf32>
    %223 = arith.addf %219, %222 : vector<16x16xf32>
    %224 = vector.extract_strided_slice %215 {offsets = [0, 2], sizes = [16, 16], strides = [1, 1]} : vector<16x18xf32> to vector<16x16xf32>
    %225 = vector.broadcast %184 : f32 to vector<16x16xf32>
    %226 = arith.mulf %224, %225 : vector<16x16xf32>
    %227 = arith.addf %223, %226 : vector<16x16xf32>
    %228 = vector.extract_strided_slice %227 {offsets = [0, 0], sizes = [1, 16], strides = [1, 1]} : vector<16x16xf32> to vector<1x16xf32>
    %c2_114 = arith.constant 2 : index
    %c0_115 = arith.constant 0 : index
    %229 = vector.load %arg7[%c2_114, %c0_115] : memref<4x256xf32, #tpu.memory_space<vmem>>, vector<1x16xf32>
    tpu.vector_store %arg7[%c2_114, %c0_115], %228 {strides = array<i32>} : memref<4x256xf32, #tpu.memory_space<vmem>>, vector<1x16xf32>,
    %230 = vector.extract_strided_slice %227 {offsets = [1, 0], sizes = [1, 16], strides = [1, 1]} : vector<16x16xf32> to vector<1x16xf32>
    %c2_116 = arith.constant 2 : index
    %c16_117 = arith.constant 16 : index
    %231 = vector.load %arg7[%c2_116, %c16_117] : memref<4x256xf32, #tpu.memory_space<vmem>>, vector<1x16xf32>
    tpu.vector_store %arg7[%c2_116, %c16_117], %230 {strides = array<i32>} : memref<4x256xf32, #tpu.memory_space<vmem>>, vector<1x16xf32>,
    %232 = vector.extract_strided_slice %227 {offsets = [2, 0], sizes = [1, 16], strides = [1, 1]} : vector<16x16xf32> to vector<1x16xf32>
    %c2_118 = arith.constant 2 : index
    %c32_119 = arith.constant 32 : index
    %233 = vector.load %arg7[%c2_118, %c32_119] : memref<4x256xf32, #tpu.memory_space<vmem>>, vector<1x16xf32>
    tpu.vector_store %arg7[%c2_118, %c32_119], %232 {strides = array<i32>} : memref<4x256xf32, #tpu.memory_space<vmem>>, vector<1x16xf32>,
    %234 = vector.extract_strided_slice %227 {offsets = [3, 0], sizes = [1, 16], strides = [1, 1]} : vector<16x16xf32> to vector<1x16xf32>
    %c2_120 = arith.constant 2 : index
    %c48_121 = arith.constant 48 : index
    %235 = vector.load %arg7[%c2_120, %c48_121] : memref<4x256xf32, #tpu.memory_space<vmem>>, vector<1x16xf32>
    tpu.vector_store %arg7[%c2_120, %c48_121], %234 {strides = array<i32>} : memref<4x256xf32, #tpu.memory_space<vmem>>, vector<1x16xf32>,
    %236 = vector.extract_strided_slice %227 {offsets = [4, 0], sizes = [1, 16], strides = [1, 1]} : vector<16x16xf32> to vector<1x16xf32>
    %c2_122 = arith.constant 2 : index
    %c64_123 = arith.constant 64 : index
    %237 = vector.load %arg7[%c2_122, %c64_123] : memref<4x256xf32, #tpu.memory_space<vmem>>, vector<1x16xf32>
    tpu.vector_store %arg7[%c2_122, %c64_123], %236 {strides = array<i32>} : memref<4x256xf32, #tpu.memory_space<vmem>>, vector<1x16xf32>,
    %238 = vector.extract_strided_slice %227 {offsets = [5, 0], sizes = [1, 16], strides = [1, 1]} : vector<16x16xf32> to vector<1x16xf32>
    %c2_124 = arith.constant 2 : index
    %c80_125 = arith.constant 80 : index
    %239 = vector.load %arg7[%c2_124, %c80_125] : memref<4x256xf32, #tpu.memory_space<vmem>>, vector<1x16xf32>
    tpu.vector_store %arg7[%c2_124, %c80_125], %238 {strides = array<i32>} : memref<4x256xf32, #tpu.memory_space<vmem>>, vector<1x16xf32>,
    %240 = vector.extract_strided_slice %227 {offsets = [6, 0], sizes = [1, 16], strides = [1, 1]} : vector<16x16xf32> to vector<1x16xf32>
    %c2_126 = arith.constant 2 : index
    %c96_127 = arith.constant 96 : index
    %241 = vector.load %arg7[%c2_126, %c96_127] : memref<4x256xf32, #tpu.memory_space<vmem>>, vector<1x16xf32>
    tpu.vector_store %arg7[%c2_126, %c96_127], %240 {strides = array<i32>} : memref<4x256xf32, #tpu.memory_space<vmem>>, vector<1x16xf32>,
    %242 = vector.extract_strided_slice %227 {offsets = [7, 0], sizes = [1, 16], strides = [1, 1]} : vector<16x16xf32> to vector<1x16xf32>
    %c2_128 = arith.constant 2 : index
    %c112_129 = arith.constant 112 : index
    %243 = vector.load %arg7[%c2_128, %c112_129] : memref<4x256xf32, #tpu.memory_space<vmem>>, vector<1x16xf32>
    tpu.vector_store %arg7[%c2_128, %c112_129], %242 {strides = array<i32>} : memref<4x256xf32, #tpu.memory_space<vmem>>, vector<1x16xf32>,
    %244 = vector.extract_strided_slice %227 {offsets = [8, 0], sizes = [1, 16], strides = [1, 1]} : vector<16x16xf32> to vector<1x16xf32>
    %c2_130 = arith.constant 2 : index
    %c128_131 = arith.constant 128 : index
    %245 = vector.load %arg7[%c2_130, %c128_131] : memref<4x256xf32, #tpu.memory_space<vmem>>, vector<1x16xf32>
    tpu.vector_store %arg7[%c2_130, %c128_131], %244 {strides = array<i32>} : memref<4x256xf32, #tpu.memory_space<vmem>>, vector<1x16xf32>,
    %246 = vector.extract_strided_slice %227 {offsets = [9, 0], sizes = [1, 16], strides = [1, 1]} : vector<16x16xf32> to vector<1x16xf32>
    %c2_132 = arith.constant 2 : index
    %c144_133 = arith.constant 144 : index
    %247 = vector.load %arg7[%c2_132, %c144_133] : memref<4x256xf32, #tpu.memory_space<vmem>>, vector<1x16xf32>
    tpu.vector_store %arg7[%c2_132, %c144_133], %246 {strides = array<i32>} : memref<4x256xf32, #tpu.memory_space<vmem>>, vector<1x16xf32>,
    %248 = vector.extract_strided_slice %227 {offsets = [10, 0], sizes = [1, 16], strides = [1, 1]} : vector<16x16xf32> to vector<1x16xf32>
    %c2_134 = arith.constant 2 : index
    %c160_135 = arith.constant 160 : index
    %249 = vector.load %arg7[%c2_134, %c160_135] : memref<4x256xf32, #tpu.memory_space<vmem>>, vector<1x16xf32>
    tpu.vector_store %arg7[%c2_134, %c160_135], %248 {strides = array<i32>} : memref<4x256xf32, #tpu.memory_space<vmem>>, vector<1x16xf32>,
    %250 = vector.extract_strided_slice %227 {offsets = [11, 0], sizes = [1, 16], strides = [1, 1]} : vector<16x16xf32> to vector<1x16xf32>
    %c2_136 = arith.constant 2 : index
    %c176_137 = arith.constant 176 : index
    %251 = vector.load %arg7[%c2_136, %c176_137] : memref<4x256xf32, #tpu.memory_space<vmem>>, vector<1x16xf32>
    tpu.vector_store %arg7[%c2_136, %c176_137], %250 {strides = array<i32>} : memref<4x256xf32, #tpu.memory_space<vmem>>, vector<1x16xf32>,
    %252 = vector.extract_strided_slice %227 {offsets = [12, 0], sizes = [1, 16], strides = [1, 1]} : vector<16x16xf32> to vector<1x16xf32>
    %c2_138 = arith.constant 2 : index
    %c192_139 = arith.constant 192 : index
    %253 = vector.load %arg7[%c2_138, %c192_139] : memref<4x256xf32, #tpu.memory_space<vmem>>, vector<1x16xf32>
    tpu.vector_store %arg7[%c2_138, %c192_139], %252 {strides = array<i32>} : memref<4x256xf32, #tpu.memory_space<vmem>>, vector<1x16xf32>,
    %254 = vector.extract_strided_slice %227 {offsets = [13, 0], sizes = [1, 16], strides = [1, 1]} : vector<16x16xf32> to vector<1x16xf32>
    %c2_140 = arith.constant 2 : index
    %c208_141 = arith.constant 208 : index
    %255 = vector.load %arg7[%c2_140, %c208_141] : memref<4x256xf32, #tpu.memory_space<vmem>>, vector<1x16xf32>
    tpu.vector_store %arg7[%c2_140, %c208_141], %254 {strides = array<i32>} : memref<4x256xf32, #tpu.memory_space<vmem>>, vector<1x16xf32>,
    %256 = vector.extract_strided_slice %227 {offsets = [14, 0], sizes = [1, 16], strides = [1, 1]} : vector<16x16xf32> to vector<1x16xf32>
    %c2_142 = arith.constant 2 : index
    %c224_143 = arith.constant 224 : index
    %257 = vector.load %arg7[%c2_142, %c224_143] : memref<4x256xf32, #tpu.memory_space<vmem>>, vector<1x16xf32>
    tpu.vector_store %arg7[%c2_142, %c224_143], %256 {strides = array<i32>} : memref<4x256xf32, #tpu.memory_space<vmem>>, vector<1x16xf32>,
    %258 = vector.extract_strided_slice %227 {offsets = [15, 0], sizes = [1, 16], strides = [1, 1]} : vector<16x16xf32> to vector<1x16xf32>
    %c2_144 = arith.constant 2 : index
    %c240_145 = arith.constant 240 : index
    %259 = vector.load %arg7[%c2_144, %c240_145] : memref<4x256xf32, #tpu.memory_space<vmem>>, vector<1x16xf32>
    tpu.vector_store %arg7[%c2_144, %c240_145], %258 {strides = array<i32>} : memref<4x256xf32, #tpu.memory_space<vmem>>, vector<1x16xf32>,
    %c27 = arith.constant 27 : index
    %260 = memref.load %arg2[%c27] : memref<36xf32, #tpu.memory_space<smem>>
    %c28 = arith.constant 28 : index
    %261 = memref.load %arg2[%c28] : memref<36xf32, #tpu.memory_space<smem>>
    %c29 = arith.constant 29 : index
    %262 = memref.load %arg2[%c29] : memref<36xf32, #tpu.memory_space<smem>>
    %c30 = arith.constant 30 : index
    %263 = memref.load %arg2[%c30] : memref<36xf32, #tpu.memory_space<smem>>
    %c31 = arith.constant 31 : index
    %264 = memref.load %arg2[%c31] : memref<36xf32, #tpu.memory_space<smem>>
    %c32_146 = arith.constant 32 : index
    %265 = memref.load %arg2[%c32_146] : memref<36xf32, #tpu.memory_space<smem>>
    %c33 = arith.constant 33 : index
    %266 = memref.load %arg2[%c33] : memref<36xf32, #tpu.memory_space<smem>>
    %c34 = arith.constant 34 : index
    %267 = memref.load %arg2[%c34] : memref<36xf32, #tpu.memory_space<smem>>
    %c35 = arith.constant 35 : index
    %268 = memref.load %arg2[%c35] : memref<36xf32, #tpu.memory_space<smem>>
    %cst_147 = arith.constant 0.000000e+00 : f32
    %269 = vector.broadcast %cst_147 : f32 to vector<16x16xf32>
    %c0_148 = arith.constant 0 : index
    %c3_149 = arith.constant 3 : index
    %c0_150 = arith.constant 0 : index
    %c0_151 = arith.constant 0 : index
    %270 = vector.load %arg6[%c0_148, %c3_149, %c0_150, %c0_151] : memref<1x4x18x18xf32, #tpu.memory_space<vmem>>, vector<1x1x16x18xf32>
    %271 = vector.shape_cast %270 : vector<1x1x16x18xf32> to vector<16x18xf32>
    %272 = vector.extract_strided_slice %271 {offsets = [0, 0], sizes = [16, 16], strides = [1, 1]} : vector<16x18xf32> to vector<16x16xf32>
    %273 = vector.broadcast %260 : f32 to vector<16x16xf32>
    %274 = arith.mulf %272, %273 : vector<16x16xf32>
    %275 = arith.addf %269, %274 : vector<16x16xf32>
    %276 = vector.extract_strided_slice %271 {offsets = [0, 1], sizes = [16, 16], strides = [1, 1]} : vector<16x18xf32> to vector<16x16xf32>
    %277 = vector.broadcast %261 : f32 to vector<16x16xf32>
    %278 = arith.mulf %276, %277 : vector<16x16xf32>
    %279 = arith.addf %275, %278 : vector<16x16xf32>
    %280 = vector.extract_strided_slice %271 {offsets = [0, 2], sizes = [16, 16], strides = [1, 1]} : vector<16x18xf32> to vector<16x16xf32>
    %281 = vector.broadcast %262 : f32 to vector<16x16xf32>
    %282 = arith.mulf %280, %281 : vector<16x16xf32>
    %283 = arith.addf %279, %282 : vector<16x16xf32>
    %c0_152 = arith.constant 0 : index
    %c3_153 = arith.constant 3 : index
    %c1_154 = arith.constant 1 : index
    %c0_155 = arith.constant 0 : index
    %284 = vector.load %arg6[%c0_152, %c3_153, %c1_154, %c0_155] : memref<1x4x18x18xf32, #tpu.memory_space<vmem>>, vector<1x1x16x18xf32>
    %285 = vector.shape_cast %284 : vector<1x1x16x18xf32> to vector<16x18xf32>
    %286 = vector.extract_strided_slice %285 {offsets = [0, 0], sizes = [16, 16], strides = [1, 1]} : vector<16x18xf32> to vector<16x16xf32>
    %287 = vector.broadcast %263 : f32 to vector<16x16xf32>
    %288 = arith.mulf %286, %287 : vector<16x16xf32>
    %289 = arith.addf %283, %288 : vector<16x16xf32>
    %290 = vector.extract_strided_slice %285 {offsets = [0, 1], sizes = [16, 16], strides = [1, 1]} : vector<16x18xf32> to vector<16x16xf32>
    %291 = vector.broadcast %264 : f32 to vector<16x16xf32>
    %292 = arith.mulf %290, %291 : vector<16x16xf32>
    %293 = arith.addf %289, %292 : vector<16x16xf32>
    %294 = vector.extract_strided_slice %285 {offsets = [0, 2], sizes = [16, 16], strides = [1, 1]} : vector<16x18xf32> to vector<16x16xf32>
    %295 = vector.broadcast %265 : f32 to vector<16x16xf32>
    %296 = arith.mulf %294, %295 : vector<16x16xf32>
    %297 = arith.addf %293, %296 : vector<16x16xf32>
    %c0_156 = arith.constant 0 : index
    %c3_157 = arith.constant 3 : index
    %c2_158 = arith.constant 2 : index
    %c0_159 = arith.constant 0 : index
    %298 = vector.load %arg6[%c0_156, %c3_157, %c2_158, %c0_159] : memref<1x4x18x18xf32, #tpu.memory_space<vmem>>, vector<1x1x16x18xf32>
    %299 = vector.shape_cast %298 : vector<1x1x16x18xf32> to vector<16x18xf32>
    %300 = vector.extract_strided_slice %299 {offsets = [0, 0], sizes = [16, 16], strides = [1, 1]} : vector<16x18xf32> to vector<16x16xf32>
    %301 = vector.broadcast %266 : f32 to vector<16x16xf32>
    %302 = arith.mulf %300, %301 : vector<16x16xf32>
    %303 = arith.addf %297, %302 : vector<16x16xf32>
    %304 = vector.extract_strided_slice %299 {offsets = [0, 1], sizes = [16, 16], strides = [1, 1]} : vector<16x18xf32> to vector<16x16xf32>
    %305 = vector.broadcast %267 : f32 to vector<16x16xf32>
    %306 = arith.mulf %304, %305 : vector<16x16xf32>
    %307 = arith.addf %303, %306 : vector<16x16xf32>
    %308 = vector.extract_strided_slice %299 {offsets = [0, 2], sizes = [16, 16], strides = [1, 1]} : vector<16x18xf32> to vector<16x16xf32>
    %309 = vector.broadcast %268 : f32 to vector<16x16xf32>
    %310 = arith.mulf %308, %309 : vector<16x16xf32>
    %311 = arith.addf %307, %310 : vector<16x16xf32>
    %312 = vector.extract_strided_slice %311 {offsets = [0, 0], sizes = [1, 16], strides = [1, 1]} : vector<16x16xf32> to vector<1x16xf32>
    %c3_160 = arith.constant 3 : index
    %c0_161 = arith.constant 0 : index
    %313 = vector.load %arg7[%c3_160, %c0_161] : memref<4x256xf32, #tpu.memory_space<vmem>>, vector<1x16xf32>
    tpu.vector_store %arg7[%c3_160, %c0_161], %312 {strides = array<i32>} : memref<4x256xf32, #tpu.memory_space<vmem>>, vector<1x16xf32>,
    %314 = vector.extract_strided_slice %311 {offsets = [1, 0], sizes = [1, 16], strides = [1, 1]} : vector<16x16xf32> to vector<1x16xf32>
    %c3_162 = arith.constant 3 : index
    %c16_163 = arith.constant 16 : index
    %315 = vector.load %arg7[%c3_162, %c16_163] : memref<4x256xf32, #tpu.memory_space<vmem>>, vector<1x16xf32>
    tpu.vector_store %arg7[%c3_162, %c16_163], %314 {strides = array<i32>} : memref<4x256xf32, #tpu.memory_space<vmem>>, vector<1x16xf32>,
    %316 = vector.extract_strided_slice %311 {offsets = [2, 0], sizes = [1, 16], strides = [1, 1]} : vector<16x16xf32> to vector<1x16xf32>
    %c3_164 = arith.constant 3 : index
    %c32_165 = arith.constant 32 : index
    %317 = vector.load %arg7[%c3_164, %c32_165] : memref<4x256xf32, #tpu.memory_space<vmem>>, vector<1x16xf32>
    tpu.vector_store %arg7[%c3_164, %c32_165], %316 {strides = array<i32>} : memref<4x256xf32, #tpu.memory_space<vmem>>, vector<1x16xf32>,
    %318 = vector.extract_strided_slice %311 {offsets = [3, 0], sizes = [1, 16], strides = [1, 1]} : vector<16x16xf32> to vector<1x16xf32>
    %c3_166 = arith.constant 3 : index
    %c48_167 = arith.constant 48 : index
    %319 = vector.load %arg7[%c3_166, %c48_167] : memref<4x256xf32, #tpu.memory_space<vmem>>, vector<1x16xf32>
    tpu.vector_store %arg7[%c3_166, %c48_167], %318 {strides = array<i32>} : memref<4x256xf32, #tpu.memory_space<vmem>>, vector<1x16xf32>,
    %320 = vector.extract_strided_slice %311 {offsets = [4, 0], sizes = [1, 16], strides = [1, 1]} : vector<16x16xf32> to vector<1x16xf32>
    %c3_168 = arith.constant 3 : index
    %c64_169 = arith.constant 64 : index
    %321 = vector.load %arg7[%c3_168, %c64_169] : memref<4x256xf32, #tpu.memory_space<vmem>>, vector<1x16xf32>
    tpu.vector_store %arg7[%c3_168, %c64_169], %320 {strides = array<i32>} : memref<4x256xf32, #tpu.memory_space<vmem>>, vector<1x16xf32>,
    %322 = vector.extract_strided_slice %311 {offsets = [5, 0], sizes = [1, 16], strides = [1, 1]} : vector<16x16xf32> to vector<1x16xf32>
    %c3_170 = arith.constant 3 : index
    %c80_171 = arith.constant 80 : index
    %323 = vector.load %arg7[%c3_170, %c80_171] : memref<4x256xf32, #tpu.memory_space<vmem>>, vector<1x16xf32>
    tpu.vector_store %arg7[%c3_170, %c80_171], %322 {strides = array<i32>} : memref<4x256xf32, #tpu.memory_space<vmem>>, vector<1x16xf32>,
    %324 = vector.extract_strided_slice %311 {offsets = [6, 0], sizes = [1, 16], strides = [1, 1]} : vector<16x16xf32> to vector<1x16xf32>
    %c3_172 = arith.constant 3 : index
    %c96_173 = arith.constant 96 : index
    %325 = vector.load %arg7[%c3_172, %c96_173] : memref<4x256xf32, #tpu.memory_space<vmem>>, vector<1x16xf32>
    tpu.vector_store %arg7[%c3_172, %c96_173], %324 {strides = array<i32>} : memref<4x256xf32, #tpu.memory_space<vmem>>, vector<1x16xf32>,
    %326 = vector.extract_strided_slice %311 {offsets = [7, 0], sizes = [1, 16], strides = [1, 1]} : vector<16x16xf32> to vector<1x16xf32>
    %c3_174 = arith.constant 3 : index
    %c112_175 = arith.constant 112 : index
    %327 = vector.load %arg7[%c3_174, %c112_175] : memref<4x256xf32, #tpu.memory_space<vmem>>, vector<1x16xf32>
    tpu.vector_store %arg7[%c3_174, %c112_175], %326 {strides = array<i32>} : memref<4x256xf32, #tpu.memory_space<vmem>>, vector<1x16xf32>,
    %328 = vector.extract_strided_slice %311 {offsets = [8, 0], sizes = [1, 16], strides = [1, 1]} : vector<16x16xf32> to vector<1x16xf32>
    %c3_176 = arith.constant 3 : index
    %c128_177 = arith.constant 128 : index
    %329 = vector.load %arg7[%c3_176, %c128_177] : memref<4x256xf32, #tpu.memory_space<vmem>>, vector<1x16xf32>
    tpu.vector_store %arg7[%c3_176, %c128_177], %328 {strides = array<i32>} : memref<4x256xf32, #tpu.memory_space<vmem>>, vector<1x16xf32>,
    %330 = vector.extract_strided_slice %311 {offsets = [9, 0], sizes = [1, 16], strides = [1, 1]} : vector<16x16xf32> to vector<1x16xf32>
    %c3_178 = arith.constant 3 : index
    %c144_179 = arith.constant 144 : index
    %331 = vector.load %arg7[%c3_178, %c144_179] : memref<4x256xf32, #tpu.memory_space<vmem>>, vector<1x16xf32>
    tpu.vector_store %arg7[%c3_178, %c144_179], %330 {strides = array<i32>} : memref<4x256xf32, #tpu.memory_space<vmem>>, vector<1x16xf32>,
    %332 = vector.extract_strided_slice %311 {offsets = [10, 0], sizes = [1, 16], strides = [1, 1]} : vector<16x16xf32> to vector<1x16xf32>
    %c3_180 = arith.constant 3 : index
    %c160_181 = arith.constant 160 : index
    %333 = vector.load %arg7[%c3_180, %c160_181] : memref<4x256xf32, #tpu.memory_space<vmem>>, vector<1x16xf32>
    tpu.vector_store %arg7[%c3_180, %c160_181], %332 {strides = array<i32>} : memref<4x256xf32, #tpu.memory_space<vmem>>, vector<1x16xf32>,
    %334 = vector.extract_strided_slice %311 {offsets = [11, 0], sizes = [1, 16], strides = [1, 1]} : vector<16x16xf32> to vector<1x16xf32>
    %c3_182 = arith.constant 3 : index
    %c176_183 = arith.constant 176 : index
    %335 = vector.load %arg7[%c3_182, %c176_183] : memref<4x256xf32, #tpu.memory_space<vmem>>, vector<1x16xf32>
    tpu.vector_store %arg7[%c3_182, %c176_183], %334 {strides = array<i32>} : memref<4x256xf32, #tpu.memory_space<vmem>>, vector<1x16xf32>,
    %336 = vector.extract_strided_slice %311 {offsets = [12, 0], sizes = [1, 16], strides = [1, 1]} : vector<16x16xf32> to vector<1x16xf32>
    %c3_184 = arith.constant 3 : index
    %c192_185 = arith.constant 192 : index
    %337 = vector.load %arg7[%c3_184, %c192_185] : memref<4x256xf32, #tpu.memory_space<vmem>>, vector<1x16xf32>
    tpu.vector_store %arg7[%c3_184, %c192_185], %336 {strides = array<i32>} : memref<4x256xf32, #tpu.memory_space<vmem>>, vector<1x16xf32>,
    %338 = vector.extract_strided_slice %311 {offsets = [13, 0], sizes = [1, 16], strides = [1, 1]} : vector<16x16xf32> to vector<1x16xf32>
    %c3_186 = arith.constant 3 : index
    %c208_187 = arith.constant 208 : index
    %339 = vector.load %arg7[%c3_186, %c208_187] : memref<4x256xf32, #tpu.memory_space<vmem>>, vector<1x16xf32>
    tpu.vector_store %arg7[%c3_186, %c208_187], %338 {strides = array<i32>} : memref<4x256xf32, #tpu.memory_space<vmem>>, vector<1x16xf32>,
    %340 = vector.extract_strided_slice %311 {offsets = [14, 0], sizes = [1, 16], strides = [1, 1]} : vector<16x16xf32> to vector<1x16xf32>
    %c3_188 = arith.constant 3 : index
    %c224_189 = arith.constant 224 : index
    %341 = vector.load %arg7[%c3_188, %c224_189] : memref<4x256xf32, #tpu.memory_space<vmem>>, vector<1x16xf32>
    tpu.vector_store %arg7[%c3_188, %c224_189], %340 {strides = array<i32>} : memref<4x256xf32, #tpu.memory_space<vmem>>, vector<1x16xf32>,
    %342 = vector.extract_strided_slice %311 {offsets = [15, 0], sizes = [1, 16], strides = [1, 1]} : vector<16x16xf32> to vector<1x16xf32>
    %c3_190 = arith.constant 3 : index
    %c240_191 = arith.constant 240 : index
    %343 = vector.load %arg7[%c3_190, %c240_191] : memref<4x256xf32, #tpu.memory_space<vmem>>, vector<1x16xf32>
    tpu.vector_store %arg7[%c3_190, %c240_191], %342 {strides = array<i32>} : memref<4x256xf32, #tpu.memory_space<vmem>>, vector<1x16xf32>,
    %c0_192 = arith.constant 0 : index
    %c0_193 = arith.constant 0 : index
    %344 = vector.load %arg7[%c0_192, %c0_193] : memref<4x256xf32, #tpu.memory_space<vmem>>, vector<1x256xf32>
    %c0_194 = arith.constant 0 : index
    %345 = memref.load %arg3[%c0_194] : memref<32xf32, #tpu.memory_space<smem>>
    %346 = vector.broadcast %345 : f32 to vector<1x256xf32>
    %347 = arith.mulf %344, %346 : vector<1x256xf32>
    %c1_195 = arith.constant 1 : index
    %c0_196 = arith.constant 0 : index
    %348 = vector.load %arg7[%c1_195, %c0_196] : memref<4x256xf32, #tpu.memory_space<vmem>>, vector<1x256xf32>
    %c1_197 = arith.constant 1 : index
    %349 = memref.load %arg3[%c1_197] : memref<32xf32, #tpu.memory_space<smem>>
    %350 = vector.broadcast %349 : f32 to vector<1x256xf32>
    %351 = arith.mulf %348, %350 : vector<1x256xf32>
    %352 = arith.addf %347, %351 : vector<1x256xf32>
    %c2_198 = arith.constant 2 : index
    %c0_199 = arith.constant 0 : index
    %353 = vector.load %arg7[%c2_198, %c0_199] : memref<4x256xf32, #tpu.memory_space<vmem>>, vector<1x256xf32>
    %c2_200 = arith.constant 2 : index
    %354 = memref.load %arg3[%c2_200] : memref<32xf32, #tpu.memory_space<smem>>
    %355 = vector.broadcast %354 : f32 to vector<1x256xf32>
    %356 = arith.mulf %353, %355 : vector<1x256xf32>
    %357 = arith.addf %352, %356 : vector<1x256xf32>
    %c3_201 = arith.constant 3 : index
    %c0_202 = arith.constant 0 : index
    %358 = vector.load %arg7[%c3_201, %c0_202] : memref<4x256xf32, #tpu.memory_space<vmem>>, vector<1x256xf32>
    %c3_203 = arith.constant 3 : index
    %359 = memref.load %arg3[%c3_203] : memref<32xf32, #tpu.memory_space<smem>>
    %360 = vector.broadcast %359 : f32 to vector<1x256xf32>
    %361 = arith.mulf %358, %360 : vector<1x256xf32>
    %362 = arith.addf %357, %361 : vector<1x256xf32>
    %c0_204 = arith.constant 0 : index
    %c0_205 = arith.constant 0 : index
    %363 = vector.load %arg4[%c0_204, %c0_205] : memref<8x1xf32, #tpu.memory_space<vmem>>, vector<1x1xf32>
    %364 = vector.broadcast %363 : vector<1x1xf32> to vector<1x256xf32>
    %365 = arith.addf %362, %364 : vector<1x256xf32>
    %c0_206 = arith.constant 0 : index
    %c0_207 = arith.constant 0 : index
    %c0_208 = arith.constant 0 : index
    %366 = vector.load %arg5[%c0_206, %c0_207, %c0_208] : memref<1x8x256xf32, #tpu.memory_space<vmem>>, vector<1x1x256xf32>
    %367 = vector.shape_cast %366 : vector<1x1x256xf32> to vector<1x256xf32>
    %368 = vector.shape_cast %365 : vector<1x256xf32> to vector<1x1x256xf32>
    tpu.vector_store %arg5[%c0_206, %c0_207, %c0_208], %368 {strides = array<i32>} : memref<1x8x256xf32, #tpu.memory_space<vmem>>, vector<1x1x256xf32>,
    %c0_209 = arith.constant 0 : index
    %c0_210 = arith.constant 0 : index
    %369 = vector.load %arg7[%c0_209, %c0_210] : memref<4x256xf32, #tpu.memory_space<vmem>>, vector<1x256xf32>
    %c4_211 = arith.constant 4 : index
    %370 = memref.load %arg3[%c4_211] : memref<32xf32, #tpu.memory_space<smem>>
    %371 = vector.broadcast %370 : f32 to vector<1x256xf32>
    %372 = arith.mulf %369, %371 : vector<1x256xf32>
    %c1_212 = arith.constant 1 : index
    %c0_213 = arith.constant 0 : index
    %373 = vector.load %arg7[%c1_212, %c0_213] : memref<4x256xf32, #tpu.memory_space<vmem>>, vector<1x256xf32>
    %c5_214 = arith.constant 5 : index
    %374 = memref.load %arg3[%c5_214] : memref<32xf32, #tpu.memory_space<smem>>
    %375 = vector.broadcast %374 : f32 to vector<1x256xf32>
    %376 = arith.mulf %373, %375 : vector<1x256xf32>
    %377 = arith.addf %372, %376 : vector<1x256xf32>
    %c2_215 = arith.constant 2 : index
    %c0_216 = arith.constant 0 : index
    %378 = vector.load %arg7[%c2_215, %c0_216] : memref<4x256xf32, #tpu.memory_space<vmem>>, vector<1x256xf32>
    %c6_217 = arith.constant 6 : index
    %379 = memref.load %arg3[%c6_217] : memref<32xf32, #tpu.memory_space<smem>>
    %380 = vector.broadcast %379 : f32 to vector<1x256xf32>
    %381 = arith.mulf %378, %380 : vector<1x256xf32>
    %382 = arith.addf %377, %381 : vector<1x256xf32>
    %c3_218 = arith.constant 3 : index
    %c0_219 = arith.constant 0 : index
    %383 = vector.load %arg7[%c3_218, %c0_219] : memref<4x256xf32, #tpu.memory_space<vmem>>, vector<1x256xf32>
    %c7_220 = arith.constant 7 : index
    %384 = memref.load %arg3[%c7_220] : memref<32xf32, #tpu.memory_space<smem>>
    %385 = vector.broadcast %384 : f32 to vector<1x256xf32>
    %386 = arith.mulf %383, %385 : vector<1x256xf32>
    %387 = arith.addf %382, %386 : vector<1x256xf32>
    %c1_221 = arith.constant 1 : index
    %c0_222 = arith.constant 0 : index
    %388 = vector.load %arg4[%c1_221, %c0_222] : memref<8x1xf32, #tpu.memory_space<vmem>>, vector<1x1xf32>
    %389 = vector.broadcast %388 : vector<1x1xf32> to vector<1x256xf32>
    %390 = arith.addf %387, %389 : vector<1x256xf32>
    %c0_223 = arith.constant 0 : index
    %c1_224 = arith.constant 1 : index
    %c0_225 = arith.constant 0 : index
    %391 = vector.load %arg5[%c0_223, %c1_224, %c0_225] : memref<1x8x256xf32, #tpu.memory_space<vmem>>, vector<1x1x256xf32>
    %392 = vector.shape_cast %391 : vector<1x1x256xf32> to vector<1x256xf32>
    %393 = vector.shape_cast %390 : vector<1x256xf32> to vector<1x1x256xf32>
    tpu.vector_store %arg5[%c0_223, %c1_224, %c0_225], %393 {strides = array<i32>} : memref<1x8x256xf32, #tpu.memory_space<vmem>>, vector<1x1x256xf32>,
    %c0_226 = arith.constant 0 : index
    %c0_227 = arith.constant 0 : index
    %394 = vector.load %arg7[%c0_226, %c0_227] : memref<4x256xf32, #tpu.memory_space<vmem>>, vector<1x256xf32>
    %c8_228 = arith.constant 8 : index
    %395 = memref.load %arg3[%c8_228] : memref<32xf32, #tpu.memory_space<smem>>
    %396 = vector.broadcast %395 : f32 to vector<1x256xf32>
    %397 = arith.mulf %394, %396 : vector<1x256xf32>
    %c1_229 = arith.constant 1 : index
    %c0_230 = arith.constant 0 : index
    %398 = vector.load %arg7[%c1_229, %c0_230] : memref<4x256xf32, #tpu.memory_space<vmem>>, vector<1x256xf32>
    %c9_231 = arith.constant 9 : index
    %399 = memref.load %arg3[%c9_231] : memref<32xf32, #tpu.memory_space<smem>>
    %400 = vector.broadcast %399 : f32 to vector<1x256xf32>
    %401 = arith.mulf %398, %400 : vector<1x256xf32>
    %402 = arith.addf %397, %401 : vector<1x256xf32>
    %c2_232 = arith.constant 2 : index
    %c0_233 = arith.constant 0 : index
    %403 = vector.load %arg7[%c2_232, %c0_233] : memref<4x256xf32, #tpu.memory_space<vmem>>, vector<1x256xf32>
    %c10_234 = arith.constant 10 : index
    %404 = memref.load %arg3[%c10_234] : memref<32xf32, #tpu.memory_space<smem>>
    %405 = vector.broadcast %404 : f32 to vector<1x256xf32>
    %406 = arith.mulf %403, %405 : vector<1x256xf32>
    %407 = arith.addf %402, %406 : vector<1x256xf32>
    %c3_235 = arith.constant 3 : index
    %c0_236 = arith.constant 0 : index
    %408 = vector.load %arg7[%c3_235, %c0_236] : memref<4x256xf32, #tpu.memory_space<vmem>>, vector<1x256xf32>
    %c11_237 = arith.constant 11 : index
    %409 = memref.load %arg3[%c11_237] : memref<32xf32, #tpu.memory_space<smem>>
    %410 = vector.broadcast %409 : f32 to vector<1x256xf32>
    %411 = arith.mulf %408, %410 : vector<1x256xf32>
    %412 = arith.addf %407, %411 : vector<1x256xf32>
    %c2_238 = arith.constant 2 : index
    %c0_239 = arith.constant 0 : index
    %413 = vector.load %arg4[%c2_238, %c0_239] : memref<8x1xf32, #tpu.memory_space<vmem>>, vector<1x1xf32>
    %414 = vector.broadcast %413 : vector<1x1xf32> to vector<1x256xf32>
    %415 = arith.addf %412, %414 : vector<1x256xf32>
    %c0_240 = arith.constant 0 : index
    %c2_241 = arith.constant 2 : index
    %c0_242 = arith.constant 0 : index
    %416 = vector.load %arg5[%c0_240, %c2_241, %c0_242] : memref<1x8x256xf32, #tpu.memory_space<vmem>>, vector<1x1x256xf32>
    %417 = vector.shape_cast %416 : vector<1x1x256xf32> to vector<1x256xf32>
    %418 = vector.shape_cast %415 : vector<1x256xf32> to vector<1x1x256xf32>
    tpu.vector_store %arg5[%c0_240, %c2_241, %c0_242], %418 {strides = array<i32>} : memref<1x8x256xf32, #tpu.memory_space<vmem>>, vector<1x1x256xf32>,
    %c0_243 = arith.constant 0 : index
    %c0_244 = arith.constant 0 : index
    %419 = vector.load %arg7[%c0_243, %c0_244] : memref<4x256xf32, #tpu.memory_space<vmem>>, vector<1x256xf32>
    %c12_245 = arith.constant 12 : index
    %420 = memref.load %arg3[%c12_245] : memref<32xf32, #tpu.memory_space<smem>>
    %421 = vector.broadcast %420 : f32 to vector<1x256xf32>
    %422 = arith.mulf %419, %421 : vector<1x256xf32>
    %c1_246 = arith.constant 1 : index
    %c0_247 = arith.constant 0 : index
    %423 = vector.load %arg7[%c1_246, %c0_247] : memref<4x256xf32, #tpu.memory_space<vmem>>, vector<1x256xf32>
    %c13_248 = arith.constant 13 : index
    %424 = memref.load %arg3[%c13_248] : memref<32xf32, #tpu.memory_space<smem>>
    %425 = vector.broadcast %424 : f32 to vector<1x256xf32>
    %426 = arith.mulf %423, %425 : vector<1x256xf32>
    %427 = arith.addf %422, %426 : vector<1x256xf32>
    %c2_249 = arith.constant 2 : index
    %c0_250 = arith.constant 0 : index
    %428 = vector.load %arg7[%c2_249, %c0_250] : memref<4x256xf32, #tpu.memory_space<vmem>>, vector<1x256xf32>
    %c14_251 = arith.constant 14 : index
    %429 = memref.load %arg3[%c14_251] : memref<32xf32, #tpu.memory_space<smem>>
    %430 = vector.broadcast %429 : f32 to vector<1x256xf32>
    %431 = arith.mulf %428, %430 : vector<1x256xf32>
    %432 = arith.addf %427, %431 : vector<1x256xf32>
    %c3_252 = arith.constant 3 : index
    %c0_253 = arith.constant 0 : index
    %433 = vector.load %arg7[%c3_252, %c0_253] : memref<4x256xf32, #tpu.memory_space<vmem>>, vector<1x256xf32>
    %c15_254 = arith.constant 15 : index
    %434 = memref.load %arg3[%c15_254] : memref<32xf32, #tpu.memory_space<smem>>
    %435 = vector.broadcast %434 : f32 to vector<1x256xf32>
    %436 = arith.mulf %433, %435 : vector<1x256xf32>
    %437 = arith.addf %432, %436 : vector<1x256xf32>
    %c3_255 = arith.constant 3 : index
    %c0_256 = arith.constant 0 : index
    %438 = vector.load %arg4[%c3_255, %c0_256] : memref<8x1xf32, #tpu.memory_space<vmem>>, vector<1x1xf32>
    %439 = vector.broadcast %438 : vector<1x1xf32> to vector<1x256xf32>
    %440 = arith.addf %437, %439 : vector<1x256xf32>
    %c0_257 = arith.constant 0 : index
    %c3_258 = arith.constant 3 : index
    %c0_259 = arith.constant 0 : index
    %441 = vector.load %arg5[%c0_257, %c3_258, %c0_259] : memref<1x8x256xf32, #tpu.memory_space<vmem>>, vector<1x1x256xf32>
    %442 = vector.shape_cast %441 : vector<1x1x256xf32> to vector<1x256xf32>
    %443 = vector.shape_cast %440 : vector<1x256xf32> to vector<1x1x256xf32>
    tpu.vector_store %arg5[%c0_257, %c3_258, %c0_259], %443 {strides = array<i32>} : memref<1x8x256xf32, #tpu.memory_space<vmem>>, vector<1x1x256xf32>,
    %c0_260 = arith.constant 0 : index
    %c0_261 = arith.constant 0 : index
    %444 = vector.load %arg7[%c0_260, %c0_261] : memref<4x256xf32, #tpu.memory_space<vmem>>, vector<1x256xf32>
    %c16_262 = arith.constant 16 : index
    %445 = memref.load %arg3[%c16_262] : memref<32xf32, #tpu.memory_space<smem>>
    %446 = vector.broadcast %445 : f32 to vector<1x256xf32>
    %447 = arith.mulf %444, %446 : vector<1x256xf32>
    %c1_263 = arith.constant 1 : index
    %c0_264 = arith.constant 0 : index
    %448 = vector.load %arg7[%c1_263, %c0_264] : memref<4x256xf32, #tpu.memory_space<vmem>>, vector<1x256xf32>
    %c17_265 = arith.constant 17 : index
    %449 = memref.load %arg3[%c17_265] : memref<32xf32, #tpu.memory_space<smem>>
    %450 = vector.broadcast %449 : f32 to vector<1x256xf32>
    %451 = arith.mulf %448, %450 : vector<1x256xf32>
    %452 = arith.addf %447, %451 : vector<1x256xf32>
    %c2_266 = arith.constant 2 : index
    %c0_267 = arith.constant 0 : index
    %453 = vector.load %arg7[%c2_266, %c0_267] : memref<4x256xf32, #tpu.memory_space<vmem>>, vector<1x256xf32>
    %c18_268 = arith.constant 18 : index
    %454 = memref.load %arg3[%c18_268] : memref<32xf32, #tpu.memory_space<smem>>
    %455 = vector.broadcast %454 : f32 to vector<1x256xf32>
    %456 = arith.mulf %453, %455 : vector<1x256xf32>
    %457 = arith.addf %452, %456 : vector<1x256xf32>
    %c3_269 = arith.constant 3 : index
    %c0_270 = arith.constant 0 : index
    %458 = vector.load %arg7[%c3_269, %c0_270] : memref<4x256xf32, #tpu.memory_space<vmem>>, vector<1x256xf32>
    %c19_271 = arith.constant 19 : index
    %459 = memref.load %arg3[%c19_271] : memref<32xf32, #tpu.memory_space<smem>>
    %460 = vector.broadcast %459 : f32 to vector<1x256xf32>
    %461 = arith.mulf %458, %460 : vector<1x256xf32>
    %462 = arith.addf %457, %461 : vector<1x256xf32>
    %c4_272 = arith.constant 4 : index
    %c0_273 = arith.constant 0 : index
    %463 = vector.load %arg4[%c4_272, %c0_273] : memref<8x1xf32, #tpu.memory_space<vmem>>, vector<1x1xf32>
    %464 = vector.broadcast %463 : vector<1x1xf32> to vector<1x256xf32>
    %465 = arith.addf %462, %464 : vector<1x256xf32>
    %c0_274 = arith.constant 0 : index
    %c4_275 = arith.constant 4 : index
    %c0_276 = arith.constant 0 : index
    %466 = vector.load %arg5[%c0_274, %c4_275, %c0_276] : memref<1x8x256xf32, #tpu.memory_space<vmem>>, vector<1x1x256xf32>
    %467 = vector.shape_cast %466 : vector<1x1x256xf32> to vector<1x256xf32>
    %468 = vector.shape_cast %465 : vector<1x256xf32> to vector<1x1x256xf32>
    tpu.vector_store %arg5[%c0_274, %c4_275, %c0_276], %468 {strides = array<i32>} : memref<1x8x256xf32, #tpu.memory_space<vmem>>, vector<1x1x256xf32>,
    %c0_277 = arith.constant 0 : index
    %c0_278 = arith.constant 0 : index
    %469 = vector.load %arg7[%c0_277, %c0_278] : memref<4x256xf32, #tpu.memory_space<vmem>>, vector<1x256xf32>
    %c20_279 = arith.constant 20 : index
    %470 = memref.load %arg3[%c20_279] : memref<32xf32, #tpu.memory_space<smem>>
    %471 = vector.broadcast %470 : f32 to vector<1x256xf32>
    %472 = arith.mulf %469, %471 : vector<1x256xf32>
    %c1_280 = arith.constant 1 : index
    %c0_281 = arith.constant 0 : index
    %473 = vector.load %arg7[%c1_280, %c0_281] : memref<4x256xf32, #tpu.memory_space<vmem>>, vector<1x256xf32>
    %c21_282 = arith.constant 21 : index
    %474 = memref.load %arg3[%c21_282] : memref<32xf32, #tpu.memory_space<smem>>
    %475 = vector.broadcast %474 : f32 to vector<1x256xf32>
    %476 = arith.mulf %473, %475 : vector<1x256xf32>
    %477 = arith.addf %472, %476 : vector<1x256xf32>
    %c2_283 = arith.constant 2 : index
    %c0_284 = arith.constant 0 : index
    %478 = vector.load %arg7[%c2_283, %c0_284] : memref<4x256xf32, #tpu.memory_space<vmem>>, vector<1x256xf32>
    %c22_285 = arith.constant 22 : index
    %479 = memref.load %arg3[%c22_285] : memref<32xf32, #tpu.memory_space<smem>>
    %480 = vector.broadcast %479 : f32 to vector<1x256xf32>
    %481 = arith.mulf %478, %480 : vector<1x256xf32>
    %482 = arith.addf %477, %481 : vector<1x256xf32>
    %c3_286 = arith.constant 3 : index
    %c0_287 = arith.constant 0 : index
    %483 = vector.load %arg7[%c3_286, %c0_287] : memref<4x256xf32, #tpu.memory_space<vmem>>, vector<1x256xf32>
    %c23_288 = arith.constant 23 : index
    %484 = memref.load %arg3[%c23_288] : memref<32xf32, #tpu.memory_space<smem>>
    %485 = vector.broadcast %484 : f32 to vector<1x256xf32>
    %486 = arith.mulf %483, %485 : vector<1x256xf32>
    %487 = arith.addf %482, %486 : vector<1x256xf32>
    %c5_289 = arith.constant 5 : index
    %c0_290 = arith.constant 0 : index
    %488 = vector.load %arg4[%c5_289, %c0_290] : memref<8x1xf32, #tpu.memory_space<vmem>>, vector<1x1xf32>
    %489 = vector.broadcast %488 : vector<1x1xf32> to vector<1x256xf32>
    %490 = arith.addf %487, %489 : vector<1x256xf32>
    %c0_291 = arith.constant 0 : index
    %c5_292 = arith.constant 5 : index
    %c0_293 = arith.constant 0 : index
    %491 = vector.load %arg5[%c0_291, %c5_292, %c0_293] : memref<1x8x256xf32, #tpu.memory_space<vmem>>, vector<1x1x256xf32>
    %492 = vector.shape_cast %491 : vector<1x1x256xf32> to vector<1x256xf32>
    %493 = vector.shape_cast %490 : vector<1x256xf32> to vector<1x1x256xf32>
    tpu.vector_store %arg5[%c0_291, %c5_292, %c0_293], %493 {strides = array<i32>} : memref<1x8x256xf32, #tpu.memory_space<vmem>>, vector<1x1x256xf32>,
    %c0_294 = arith.constant 0 : index
    %c0_295 = arith.constant 0 : index
    %494 = vector.load %arg7[%c0_294, %c0_295] : memref<4x256xf32, #tpu.memory_space<vmem>>, vector<1x256xf32>
    %c24_296 = arith.constant 24 : index
    %495 = memref.load %arg3[%c24_296] : memref<32xf32, #tpu.memory_space<smem>>
    %496 = vector.broadcast %495 : f32 to vector<1x256xf32>
    %497 = arith.mulf %494, %496 : vector<1x256xf32>
    %c1_297 = arith.constant 1 : index
    %c0_298 = arith.constant 0 : index
    %498 = vector.load %arg7[%c1_297, %c0_298] : memref<4x256xf32, #tpu.memory_space<vmem>>, vector<1x256xf32>
    %c25_299 = arith.constant 25 : index
    %499 = memref.load %arg3[%c25_299] : memref<32xf32, #tpu.memory_space<smem>>
    %500 = vector.broadcast %499 : f32 to vector<1x256xf32>
    %501 = arith.mulf %498, %500 : vector<1x256xf32>
    %502 = arith.addf %497, %501 : vector<1x256xf32>
    %c2_300 = arith.constant 2 : index
    %c0_301 = arith.constant 0 : index
    %503 = vector.load %arg7[%c2_300, %c0_301] : memref<4x256xf32, #tpu.memory_space<vmem>>, vector<1x256xf32>
    %c26_302 = arith.constant 26 : index
    %504 = memref.load %arg3[%c26_302] : memref<32xf32, #tpu.memory_space<smem>>
    %505 = vector.broadcast %504 : f32 to vector<1x256xf32>
    %506 = arith.mulf %503, %505 : vector<1x256xf32>
    %507 = arith.addf %502, %506 : vector<1x256xf32>
    %c3_303 = arith.constant 3 : index
    %c0_304 = arith.constant 0 : index
    %508 = vector.load %arg7[%c3_303, %c0_304] : memref<4x256xf32, #tpu.memory_space<vmem>>, vector<1x256xf32>
    %c27_305 = arith.constant 27 : index
    %509 = memref.load %arg3[%c27_305] : memref<32xf32, #tpu.memory_space<smem>>
    %510 = vector.broadcast %509 : f32 to vector<1x256xf32>
    %511 = arith.mulf %508, %510 : vector<1x256xf32>
    %512 = arith.addf %507, %511 : vector<1x256xf32>
    %c6_306 = arith.constant 6 : index
    %c0_307 = arith.constant 0 : index
    %513 = vector.load %arg4[%c6_306, %c0_307] : memref<8x1xf32, #tpu.memory_space<vmem>>, vector<1x1xf32>
    %514 = vector.broadcast %513 : vector<1x1xf32> to vector<1x256xf32>
    %515 = arith.addf %512, %514 : vector<1x256xf32>
    %c0_308 = arith.constant 0 : index
    %c6_309 = arith.constant 6 : index
    %c0_310 = arith.constant 0 : index
    %516 = vector.load %arg5[%c0_308, %c6_309, %c0_310] : memref<1x8x256xf32, #tpu.memory_space<vmem>>, vector<1x1x256xf32>
    %517 = vector.shape_cast %516 : vector<1x1x256xf32> to vector<1x256xf32>
    %518 = vector.shape_cast %515 : vector<1x256xf32> to vector<1x1x256xf32>
    tpu.vector_store %arg5[%c0_308, %c6_309, %c0_310], %518 {strides = array<i32>} : memref<1x8x256xf32, #tpu.memory_space<vmem>>, vector<1x1x256xf32>,
    %c0_311 = arith.constant 0 : index
    %c0_312 = arith.constant 0 : index
    %519 = vector.load %arg7[%c0_311, %c0_312] : memref<4x256xf32, #tpu.memory_space<vmem>>, vector<1x256xf32>
    %c28_313 = arith.constant 28 : index
    %520 = memref.load %arg3[%c28_313] : memref<32xf32, #tpu.memory_space<smem>>
    %521 = vector.broadcast %520 : f32 to vector<1x256xf32>
    %522 = arith.mulf %519, %521 : vector<1x256xf32>
    %c1_314 = arith.constant 1 : index
    %c0_315 = arith.constant 0 : index
    %523 = vector.load %arg7[%c1_314, %c0_315] : memref<4x256xf32, #tpu.memory_space<vmem>>, vector<1x256xf32>
    %c29_316 = arith.constant 29 : index
    %524 = memref.load %arg3[%c29_316] : memref<32xf32, #tpu.memory_space<smem>>
    %525 = vector.broadcast %524 : f32 to vector<1x256xf32>
    %526 = arith.mulf %523, %525 : vector<1x256xf32>
    %527 = arith.addf %522, %526 : vector<1x256xf32>
    %c2_317 = arith.constant 2 : index
    %c0_318 = arith.constant 0 : index
    %528 = vector.load %arg7[%c2_317, %c0_318] : memref<4x256xf32, #tpu.memory_space<vmem>>, vector<1x256xf32>
    %c30_319 = arith.constant 30 : index
    %529 = memref.load %arg3[%c30_319] : memref<32xf32, #tpu.memory_space<smem>>
    %530 = vector.broadcast %529 : f32 to vector<1x256xf32>
    %531 = arith.mulf %528, %530 : vector<1x256xf32>
    %532 = arith.addf %527, %531 : vector<1x256xf32>
    %c3_320 = arith.constant 3 : index
    %c0_321 = arith.constant 0 : index
    %533 = vector.load %arg7[%c3_320, %c0_321] : memref<4x256xf32, #tpu.memory_space<vmem>>, vector<1x256xf32>
    %c31_322 = arith.constant 31 : index
    %534 = memref.load %arg3[%c31_322] : memref<32xf32, #tpu.memory_space<smem>>
    %535 = vector.broadcast %534 : f32 to vector<1x256xf32>
    %536 = arith.mulf %533, %535 : vector<1x256xf32>
    %537 = arith.addf %532, %536 : vector<1x256xf32>
    %c7_323 = arith.constant 7 : index
    %c0_324 = arith.constant 0 : index
    %538 = vector.load %arg4[%c7_323, %c0_324] : memref<8x1xf32, #tpu.memory_space<vmem>>, vector<1x1xf32>
    %539 = vector.broadcast %538 : vector<1x1xf32> to vector<1x256xf32>
    %540 = arith.addf %537, %539 : vector<1x256xf32>
    %c0_325 = arith.constant 0 : index
    %c7_326 = arith.constant 7 : index
    %c0_327 = arith.constant 0 : index
    %541 = vector.load %arg5[%c0_325, %c7_326, %c0_327] : memref<1x8x256xf32, #tpu.memory_space<vmem>>, vector<1x1x256xf32>
    %542 = vector.shape_cast %541 : vector<1x1x256xf32> to vector<1x256xf32>
    %543 = vector.shape_cast %540 : vector<1x256xf32> to vector<1x1x256xf32>
    tpu.vector_store %arg5[%c0_325, %c7_326, %c0_327], %543 {strides = array<i32>} : memref<1x8x256xf32, #tpu.memory_space<vmem>>, vector<1x1x256xf32>,
    return
  }
  func.func @transform_0(%arg0: i32) -> (i32, i32, i32, i32) {
    %c0_i32 = arith.constant 0 : i32
    %c0_i32_0 = arith.constant 0 : i32
    %c0_i32_1 = arith.constant 0 : i32
    %c0_i32_2 = arith.constant 0 : i32
    return %arg0, %c0_i32, %c0_i32_0, %c0_i32_1 : i32, i32, i32, i32
  }
  func.func @transform_1(%arg0: i32) -> i32 {
    %c0_i32 = arith.constant 0 : i32
    %c0_i32_0 = arith.constant 0 : i32
    return %c0_i32 : i32
  }
  func.func @transform_2(%arg0: i32) -> i32 {
    %c0_i32 = arith.constant 0 : i32
    %c0_i32_0 = arith.constant 0 : i32
    return %c0_i32 : i32
  }
  func.func @transform_3(%arg0: i32) -> (i32, i32) {
    %c0_i32 = arith.constant 0 : i32
    %c0_i32_0 = arith.constant 0 : i32
    %c0_i32_1 = arith.constant 0 : i32
    return %c0_i32, %c0_i32_0 : i32, i32
  }
  func.func @transform_4(%arg0: i32) -> (i32, i32, i32) {
    %c0_i32 = arith.constant 0 : i32
    %c0_i32_0 = arith.constant 0 : i32
    %c0_i32_1 = arith.constant 0 : i32
    return %arg0, %c0_i32, %c0_i32_0 : i32, i32, i32
  }
}

</mosaic_0001>

<llo_original>
// kernel: tpu_custom_call.1
$region0: #{tpu_custom_call.1}
  #allocation0 [shape = 'u32[]', space=smem, size = 0x4, offset = 0x4, fixed_abs, tag = 'smem constant byte address 0x4 - core index']
  #allocation1 [shape = 'u32[144,128]{1,0:T(1,128)}', space=vmem, size = 0x12000, scoped, tag = 'internal scratch']
  #allocation2 [shape = 'f32[1,4,18,18]{3,2,1,0:T(8,128)}', space=vmem, size = 0xc000, scoped, tag = 'scratch operand']
  #allocation3 [shape = 'f32[4,256]{1,0:T(4,128)}', space=vmem, size = 0x1000, scoped, tag = 'scratch operand']
  %s0 = inlined_call_operand.hbm [shape: f32[2,4,16,16], index: 0, kind: input, shape index: {}]
  %s1 = inlined_call_operand.vmem [shape: f32[36], index: 1, kind: input, shape index: {}]
  %s2 = inlined_call_operand.vmem [shape: f32[32], index: 2, kind: input, shape index: {}]
  %s3 = inlined_call_operand.vmem [shape: f32[8,1], index: 3, kind: input, shape index: {}]
  %s4 = inlined_call_operand.hbm [shape: f32[2,8,256], index: 4, kind: output, shape index: {}]
  %s5 = sld [smem:[#allocation0]]
  $region61: #{tpu_custom_call.1} parent=0
    _
  %s7 = ssub.s32 1, %s5
  %s8 = scalar_select 0, %s7, %s5
  $region1: #{tpu_custom_call.1} parent=0
    #allocation4 [shape = 'u8[65536]{0}', space=vmem, size = 0x10000, scoped, tag = 'input window, operand 0']
    #allocation5 [shape = 's32[2]{0}', space=sflag, size = 0x8, scoped, tag = 'scoped memory for tpu_custom_call.1']
    #allocation6 [shape = 's32[2]{0}', space=sflag, size = 0x8, scoped, tag = 'scoped memory for tpu_custom_call.1']
    #allocation7 [shape = 's32[2]{0}', space=sflag, size = 0x8, scoped, tag = 'scoped memory for tpu_custom_call.1']
    #allocation8 [shape = 'u8[512]{0}', space=smem, size = 0x200, scoped, tag = 'input window, operand 1, single buffered']
    #allocation9 [shape = 'u8[512]{0}', space=smem, size = 0x200, scoped, tag = 'input window, operand 2, single buffered']
    #allocation10 [shape = 's32[1]{0}', space=sflag, size = 0x4, scoped, tag = 'scoped memory for tpu_custom_call.1']
    #allocation11 [shape = 'u8[16384]{0}', space=vmem, size = 0x4000, scoped, tag = 'output window, operand 0']
    %9 = vsyncpa [#allocation5], 0
    %s10 = scalar_lea.sflag [#allocation5], 1
    %11 = vsyncpa %s10, 0
    %12 = vsyncpa [#allocation7], 0
    %13 = vsyncpa [#allocation10], 0
    %14 = vsyncpa [#allocation6], 0
    %s15 = scalar_lea.sflag [#allocation6], 1
    %16 = vsyncpa %s15, 0
    loop: start=0, step=1, limit=4
    $region2: #{tpu_custom_call.1} parent=1 // loop_pre_header
      _
    $region3: #{tpu_custom_call.1} parent=1 // loop_header
      %s18 = sphi 0, %s22
      %p19 = scmp.ge.s32.totalorder %s18, 4
      %s28 = sphi 0, %s30
      %s31 = sphi 0, %s28
      %s32 = sphi 0, %s31
      %s48 = sphi 0, %s32
      %s52 = sphi 0, %s52
      %s54 = sphi 0, %s52
      %s55 = sphi 0, %s54
      %s69 = sphi 0, %s55
      %s73 = sphi 0, %s73
      %s75 = sphi 0, %s73
      %s76 = sphi 0, %s75
      %s90 = sphi 0, %s76
      %s94 = sphi 0, %s94
      %s96 = sphi 0, %s94
      %s97 = sphi 0, %s96
      %s111 = sphi 0, %s97
      %s117 = sphi 0, %s119
      %s120 = sphi 0, %s117
      %s121 = sphi 0, %s120
      %s137 = sphi 0, %s121
    $region4: #{tpu_custom_call.1} parent=1 // loop_header_branch
      %21 = sbr.rel (%p19) target = $region8
    $region5: #{tpu_custom_call.1} parent=1 // loop_body
      %s23 = ssub.s32 %s18, 1
      %s24 = ssub.s32 %s18, 2
      %s25 = sadd.s32 %s18, 1
      %s26 = ssub.s32 %s18, %s25
      %p27 = scmp.eq.s32.totalorder %s26, 0
      %s29 = sadd.s32 %s28, 1
      %s30 = scalar_select %p27, %s28, %s29
      %p33 = pneg %p27
      %p34 = scmp.eq.s32.totalorder %s18, 1
      %p35 = por %p33, %p34
      %p36 = scmp.ne.s32.totalorder %s28, %s31
      %p37 = scmp.eq.s32.totalorder %s18, 0
      %p38 = por %p36, %p37
      %p39 = scmp.ne.s32.totalorder %s28, %s31
      %p40 = scmp.eq.s32.totalorder %s23, 1
      %p41 = por %p39, %p40
      %p42 = scmp.ne.s32.totalorder %s31, %s32
      %p43 = scmp.eq.s32.totalorder %s23, 0
      %p44 = por %p42, %p43
      %p45 = scmp.ne.s32.totalorder %s31, %s32
      %p46 = scmp.eq.s32.totalorder %s24, 1
      %p47 = por %p45, %p46
      %p49 = scmp.ne.s32.totalorder %s32, %s48
      %p50 = scmp.eq.s32.totalorder %s24, 0
      %p51 = por %p49, %p50
      %s53 = sadd.s32 %s52, 1
      %p56 = scmp.eq.s32.totalorder %s18, 1
      %p57 = scmp.ne.s32.totalorder %s52, %s54
      %p58 = scmp.eq.s32.totalorder %s18, 0
      %p59 = por %p57, %p58
      %p60 = scmp.ne.s32.totalorder %s52, %s54
      %p61 = scmp.eq.s32.totalorder %s23, 1
      %p62 = por %p60, %p61
      %p63 = scmp.ne.s32.totalorder %s54, %s55
      %p64 = scmp.eq.s32.totalorder %s23, 0
      %p65 = por %p63, %p64
      %p66 = scmp.ne.s32.totalorder %s54, %s55
      %p67 = scmp.eq.s32.totalorder %s24, 1
      %p68 = por %p66, %p67
      %p70 = scmp.ne.s32.totalorder %s55, %s69
      %p71 = scmp.eq.s32.totalorder %s24, 0
      %p72 = por %p70, %p71
      %s74 = sadd.s32 %s73, 1
      %p77 = scmp.eq.s32.totalorder %s18, 1
      %p78 = scmp.ne.s32.totalorder %s73, %s75
      %p79 = scmp.eq.s32.totalorder %s18, 0
      %p80 = por %p78, %p79
      %p81 = scmp.ne.s32.totalorder %s73, %s75
      %p82 = scmp.eq.s32.totalorder %s23, 1
      %p83 = por %p81, %p82
      %p84 = scmp.ne.s32.totalorder %s75, %s76
      %p85 = scmp.eq.s32.totalorder %s23, 0
      %p86 = por %p84, %p85
      %p87 = scmp.ne.s32.totalorder %s75, %s76
      %p88 = scmp.eq.s32.totalorder %s24, 1
      %p89 = por %p87, %p88
      %p91 = scmp.ne.s32.totalorder %s76, %s90
      %p92 = scmp.eq.s32.totalorder %s24, 0
      %p93 = por %p91, %p92
      %s95 = sadd.s32 %s94, 1
      %p98 = scmp.eq.s32.totalorder %s18, 1
      %p99 = scmp.ne.s32.totalorder %s94, %s96
      %p100 = scmp.eq.s32.totalorder %s18, 0
      %p101 = por %p99, %p100
      %p102 = scmp.ne.s32.totalorder %s94, %s96
      %p103 = scmp.eq.s32.totalorder %s23, 1
      %p104 = por %p102, %p103
      %p105 = scmp.ne.s32.totalorder %s96, %s97
      %p106 = scmp.eq.s32.totalorder %s23, 0
      %p107 = por %p105, %p106
      %p108 = scmp.ne.s32.totalorder %s96, %s97
      %p109 = scmp.eq.s32.totalorder %s24, 1
      %p110 = por %p108, %p109
      %p112 = scmp.ne.s32.totalorder %s97, %s111
      %p113 = scmp.eq.s32.totalorder %s24, 0
      %p114 = por %p112, %p113
      %s115 = ssub.s32 %s18, %s25
      %p116 = scmp.eq.s32.totalorder %s115, 0
      %s118 = sadd.s32 %s117, 1
      %s119 = scalar_select %p116, %s117, %s118
      %p122 = pneg %p116
      %p123 = scmp.eq.s32.totalorder %s18, 1
      %p124 = por %p122, %p123
      %p125 = scmp.ne.s32.totalorder %s117, %s120
      %p126 = scmp.eq.s32.totalorder %s18, 0
      %p127 = por %p125, %p126
      %p128 = scmp.ne.s32.totalorder %s117, %s120
      %p129 = scmp.eq.s32.totalorder %s23, 1
      %p130 = por %p128, %p129
      %p131 = scmp.ne.s32.totalorder %s120, %s121
      %p132 = scmp.eq.s32.totalorder %s23, 0
      %p133 = por %p131, %p132
      %p134 = scmp.ne.s32.totalorder %s120, %s121
      %p135 = scmp.eq.s32.totalorder %s24, 1
      %p136 = por %p134, %p135
      %p138 = scmp.ne.s32.totalorder %s121, %s137
      %p139 = scmp.eq.s32.totalorder %s24, 0
      %p140 = por %p138, %p139
      %p141 = scmp.le.s32.totalorder 1, %s18
      %p142 = scmp.lt.s32.totalorder %s18, 3
      %p143 = pnand %p141, %p142
      %p144 = pneg %p143
      // Predicated region
      $region9: #{tpu_custom_call.1} parent=5 // pred_check
        _
      $region10: #{tpu_custom_call.1} parent=5 // pred_check_branch
        %146 = sbr.rel (%p143) target = $region12
      $region11: #{tpu_custom_call.1} parent=5 // pred_region
        %s147 = ssub.s32 %s18, 1
        // Predicated region
        $region13: #{tpu_custom_call.1} parent=11 // pred_check
          %p148 = pneg %p65
        $region14: #{tpu_custom_call.1} parent=11 // pred_check_branch
          %150 = sbr.rel (%p148) target = $region16
        $region15: #{tpu_custom_call.1} parent=11 // pred_region
          %s152 = ssub.s32 16, 16
          %153 = vsyncadd [#allocation7], %s152
          %s155 = sshll.u32 %s1, 4
          %s156 = int_to_ptr.vmem [resolvable:$true] %s155
          %158 = dma.vmem_to_smem %s156, 16, [#allocation8], [#allocation7]
        $region16: #{tpu_custom_call.1} parent=11 // pred_fallthru
          _
        // Predicated region
        $region17: #{tpu_custom_call.1} parent=11 // pred_check
          %p159 = pneg %p86
        $region18: #{tpu_custom_call.1} parent=11 // pred_check_branch
          %161 = sbr.rel (%p159) target = $region20
        $region19: #{tpu_custom_call.1} parent=11 // pred_region
          %s163 = ssub.s32 16, 16
          %164 = vsyncadd [#allocation10], %s163
          %s166 = sshll.u32 %s2, 4
          %s167 = int_to_ptr.vmem [resolvable:$true] %s166
          %169 = dma.vmem_to_smem %s167, 16, [#allocation9], [#allocation10]
        $region20: #{tpu_custom_call.1} parent=11 // pred_fallthru
          _
        // Predicated region
        $region21: #{tpu_custom_call.1} parent=11 // pred_check
          %p170 = pneg %p107
        $region22: #{tpu_custom_call.1} parent=11 // pred_check_branch
          %172 = sbr.rel (%p170) target = $region24
        $region23: #{tpu_custom_call.1} parent=11 // pred_region
          _
        $region24: #{tpu_custom_call.1} parent=11 // pred_fallthru
          _
      $region12: #{tpu_custom_call.1} parent=5 // pred_fallthru
        _
      %p173 = scmp.lt.s32.totalorder %s18, 2
      // Predicated region
      $region25: #{tpu_custom_call.1} parent=5 // pred_check
        %p174 = pneg %p173
      $region26: #{tpu_custom_call.1} parent=5 // pred_check_branch
        %176 = sbr.rel (%p174) target = $region28
      $region27: #{tpu_custom_call.1} parent=5 // pred_region
        // Predicated region
        $region29: #{tpu_custom_call.1} parent=27 // pred_check
          %p177 = pneg %p38
        $region30: #{tpu_custom_call.1} parent=27 // pred_check_branch
          %179 = sbr.rel (%p177) target = $region32
        $region31: #{tpu_custom_call.1} parent=27 // pred_region
          %s180 = sand.u32 %s28, 1
          %s181 = scalar_lea.sflag [#allocation5], %s180
          %s182 = sand.u32 %s28, 1
          %s183 = smul.addr %s182, 64
          %s184 = scalar_lea.vmem [#allocation4], %s183
          %s186 = ssub.s32 1024, 1024
          %187 = vsyncadd %s181, %s186
          %s188 = smul.addr %s18, 8
          %s189 = smul.addr %s188, 128
          %s190 = scalar_lea.hbm %s0, %s189
          %s191 = sshll.u32 %s184, 4
          %s192 = int_to_ptr.vmem [resolvable:$true] %s191
          %197 = dma.hbm_to_vmem [thread:$0]  %s190, 1024, %s192, %s181, 128, 128, 8
        $region32: #{tpu_custom_call.1} parent=27 // pred_fallthru
          _
      $region28: #{tpu_custom_call.1} parent=5 // pred_fallthru
        _
      %p198 = scmp.le.s32.totalorder 1, %s18
      %p199 = scmp.lt.s32.totalorder %s18, 3
      %p200 = pnand %p198, %p199
      %p201 = pneg %p200
      // Predicated region
      $region33: #{tpu_custom_call.1} parent=5 // pred_check
        _
      $region34: #{tpu_custom_call.1} parent=5 // pred_check_branch
        %203 = sbr.rel (%p200) target = $region36
      $region35: #{tpu_custom_call.1} parent=5 // pred_region
        %s204 = ssub.s32 %s18, 1
        %s205 = sand.u32 %s31, 1
        %s206 = scalar_lea.sflag [#allocation5], %s205
        %s207 = sand.u32 %s31, 1
        %s208 = smul.addr %s207, 64
        %s209 = scalar_lea.vmem [#allocation4], %s208
        // Predicated region
        $region37: #{tpu_custom_call.1} parent=35 // pred_check
          %p210 = pneg %p44
        $region38: #{tpu_custom_call.1} parent=35 // pred_check_branch
          %212 = sbr.rel (%p210) target = $region40
        $region39: #{tpu_custom_call.1} parent=35 // pred_region
          %213 = dma.done %s206, 1024
        $region40: #{tpu_custom_call.1} parent=35 // pred_fallthru
          _
        // Predicated region
        $region41: #{tpu_custom_call.1} parent=35 // pred_check
          %p214 = pneg %p65
        $region42: #{tpu_custom_call.1} parent=35 // pred_check_branch
          %216 = sbr.rel (%p214) target = $region44
        $region43: #{tpu_custom_call.1} parent=35 // pred_region
          %217 = dma.done [#allocation7], 16
        $region44: #{tpu_custom_call.1} parent=35 // pred_fallthru
          _
        // Predicated region
        $region45: #{tpu_custom_call.1} parent=35 // pred_check
          %p218 = pneg %p86
        $region46: #{tpu_custom_call.1} parent=35 // pred_check_branch
          %220 = sbr.rel (%p218) target = $region48
        $region47: #{tpu_custom_call.1} parent=35 // pred_region
          %221 = dma.done [#allocation10], 16
        $region48: #{tpu_custom_call.1} parent=35 // pred_fallthru
          _
        %222 = sfence
        %s223 = sand.u32 %s31, 1
        %s224 = scalar_lea.sflag [#allocation5], %s223
        %s225 = sand.u32 %s31, 1
        %s226 = smul.addr %s225, 64
        %s227 = scalar_lea.vmem [#allocation4], %s226
        %p228 = pneg %p44
        %p229 = pneg %p41
        %p230 = pneg %p65
        %p231 = pneg %p62
        %p232 = pneg %p86
        %p233 = pneg %p83
        %p234 = pneg %p107
        %p235 = pneg %p104
        %p236 = pneg %p133
        %p237 = pneg %p130
        %s238 = sand.u32 %s120, 1
        %s239 = scalar_lea.sflag [#allocation6], %s238
        %s240 = sand.u32 %s120, 1
        %s241 = smul.addr %s240, 16
        %s242 = scalar_lea.vmem [#allocation11], %s241
        %vm243 = vcmask 139264
        %244 = vst.msk [vmem:[#allocation2] sm:$0x1] %vm243, 0.0
        %245 = vst.msk [vmem:[#allocation2 + $0x18] sm:$0x1] %vm243, 0.0
        %246 = vst.msk [vmem:[#allocation2 + $0x30] sm:$0x1] %vm243, 0.0
        %247 = vst.msk [vmem:[#allocation2 + $0x48] sm:$0x1] %vm243, 0.0
        %248 = vst.msk [vmem:[#allocation2 + $0x11] sm:$0x1] %vm243, 0.0
        %249 = vst.msk [vmem:[#allocation2 + $0x29] sm:$0x1] %vm243, 0.0
        %250 = vst.msk [vmem:[#allocation2 + $0x41] sm:$0x1] %vm243, 0.0
        %251 = vst.msk [vmem:[#allocation2 + $0x59] sm:$0x1] %vm243, 0.0
        %vm252 = vcmask 7168
        %253 = vst.msk [vmem:[#allocation2] sm:$0xff] %vm252, 0.0
        %254 = vst.msk [vmem:[#allocation2 + $0x8] sm:$0xff] %vm252, 0.0
        %vm255 = vcmask 1024
        %256 = vst.msk [vmem:[#allocation2 + $0x10] sm:$0x3] %vm255, 0.0
        %257 = vst.msk [vmem:[#allocation2 + $0x18] sm:$0xff] %vm252, 0.0
        %258 = vst.msk [vmem:[#allocation2 + $0x20] sm:$0xff] %vm252, 0.0
        %259 = vst.msk [vmem:[#allocation2 + $0x28] sm:$0x3] %vm255, 0.0
        %260 = vst.msk [vmem:[#allocation2 + $0x30] sm:$0xff] %vm252, 0.0
        %261 = vst.msk [vmem:[#allocation2 + $0x38] sm:$0xff] %vm252, 0.0
        %262 = vst.msk [vmem:[#allocation2 + $0x40] sm:$0x3] %vm255, 0.0
        %263 = vst.msk [vmem:[#allocation2 + $0x48] sm:$0xff] %vm252, 0.0
        %264 = vst.msk [vmem:[#allocation2 + $0x50] sm:$0xff] %vm252, 0.0
        %265 = vst.msk [vmem:[#allocation2 + $0x58] sm:$0x3] %vm255, 0.0
        %vm266 = vcmask 146568
        %267 = vst.msk [vmem:[#allocation2] sm:$0xff] %vm266, 0.0
        %268 = vst.msk [vmem:[#allocation2 + $0x8] sm:$0xff] %vm266, 0.0
        %vm269 = vcmask 140424
        %270 = vst.msk [vmem:[#allocation2 + $0x10] sm:$0x3] %vm269, 0.0
        %271 = vst.msk [vmem:[#allocation2 + $0x18] sm:$0xff] %vm266, 0.0
        %272 = vst.msk [vmem:[#allocation2 + $0x20] sm:$0xff] %vm266, 0.0
        %273 = vst.msk [vmem:[#allocation2 + $0x28] sm:$0x3] %vm269, 0.0
        %274 = vst.msk [vmem:[#allocation2 + $0x30] sm:$0xff] %vm266, 0.0
        %275 = vst.msk [vmem:[#allocation2 + $0x38] sm:$0xff] %vm266, 0.0
        %276 = vst.msk [vmem:[#allocation2 + $0x40] sm:$0x3] %vm269, 0.0
        %277 = vst.msk [vmem:[#allocation2 + $0x48] sm:$0xff] %vm266, 0.0
        %278 = vst.msk [vmem:[#allocation2 + $0x50] sm:$0xff] %vm266, 0.0
        %279 = vst.msk [vmem:[#allocation2 + $0x58] sm:$0x3] %vm269, 0.0
        %v280 = vld [vmem:[%s209] sm:$0xff]
        %v281 = vld [vmem:[%s209 + $0x8] sm:$0xff]
        %v282 = vld [vmem:[%s209 + $0x10] sm:$0xff]
        %v283 = vld [vmem:[%s209 + $0x18] sm:$0xff]
        %v284 = vld [vmem:[%s209 + $0x20] sm:$0xff]
        %v285 = vld [vmem:[%s209 + $0x28] sm:$0xff]
        %v286 = vld [vmem:[%s209 + $0x30] sm:$0xff]
        %v287 = vld [vmem:[%s209 + $0x38] sm:$0xff]
        %296 = vrot.lane.b32.xlu0 %v280, 1
        %v297 = vpop.permute.xlu0 %296
        %298 = vrot.lane.b32.xlu0 %v281, 1
        %v299 = vpop.permute.xlu0 %298
        %300 = vrot.lane.b32.xlu0 %v282, 1
        %v301 = vpop.permute.xlu0 %300
        %302 = vrot.lane.b32.xlu0 %v283, 1
        %v303 = vpop.permute.xlu0 %302
        %304 = vrot.lane.b32.xlu0 %v284, 1
        %v305 = vpop.permute.xlu0 %304
        %306 = vrot.lane.b32.xlu0 %v285, 1
        %v307 = vpop.permute.xlu0 %306
        %308 = vrot.lane.b32.xlu0 %v286, 1
        %v309 = vpop.permute.xlu0 %308
        %310 = vrot.lane.b32.xlu0 %v287, 1
        %v311 = vpop.permute.xlu0 %310
        %vm320 = vcmask 138248
        %321 = vst.msk [vmem:[#allocation2 + $0x1] sm:$0xff] %vm320, %v297
        %322 = vst.msk [vmem:[#allocation2 + $0x9] sm:$0xff] %vm320, %v299
        %323 = vst.msk [vmem:[#allocation2 + $0x19] sm:$0xff] %vm320, %v301
        %324 = vst.msk [vmem:[#allocation2 + $0x21] sm:$0xff] %vm320, %v303
        %325 = vst.msk [vmem:[#allocation2 + $0x31] sm:$0xff] %vm320, %v305
        %326 = vst.msk [vmem:[#allocation2 + $0x39] sm:$0xff] %vm320, %v307
        %327 = vst.msk [vmem:[#allocation2 + $0x49] sm:$0xff] %vm320, %v309
        %328 = vst.msk [vmem:[#allocation2 + $0x51] sm:$0xff] %vm320, %v311
        %s329 = sld [smem:[#allocation8]]
        %s330 = sld [smem:[#allocation8 + $0x1]]
        %s331 = sld [smem:[#allocation8 + $0x2]]
        %s332 = sld [smem:[#allocation8 + $0x3]]
        %s333 = sld [smem:[#allocation8 + $0x4]]
        %s334 = sld [smem:[#allocation8 + $0x5]]
        %s335 = sld [smem:[#allocation8 + $0x6]]
        %s336 = sld [smem:[#allocation8 + $0x7]]
        %s337 = sld [smem:[#allocation8 + $0x8]]
        %v338 = vld [vmem:[#allocation2] sm:$0xff]
        %v339 = vld [vmem:[#allocation2 + $0x8] sm:$0xff]
        %v340 = vstv %s329
        %v341 = vmul.f32 %v338, %v340
        %v342 = vmul.f32 %v339, %v340
        %v343 = vadd.f32 %v341, 0.0
        %v344 = vadd.f32 %v342, 0.0
        %v345 = vstv %s330
        %v346 = vmul.f32 %v338, %v345
        %v347 = vmul.f32 %v339, %v345
        %350 = vrot.lane.b32.xlu0 %v346, 127
        %v351 = vpop.permute.xlu0 %350
        %352 = vrot.lane.b32.xlu0 %v347, 127
        %v353 = vpop.permute.xlu0 %352
        %v356 = vadd.f32 %v343, %v351
        %v357 = vadd.f32 %v344, %v353
        %v358 = vstv %s331
        %v359 = vmul.f32 %v338, %v358
        %v360 = vmul.f32 %v339, %v358
        %363 = vrot.lane.b32.xlu0 %v359, 126
        %v364 = vpop.permute.xlu0 %363
        %365 = vrot.lane.b32.xlu0 %v360, 126
        %v366 = vpop.permute.xlu0 %365
        %v369 = vadd.f32 %v356, %v364
        %v370 = vadd.f32 %v357, %v366
        %v371 = vld [vmem:[#allocation2 + $0x1] sm:$0xff]
        %v372 = vld [vmem:[#allocation2 + $0x9] sm:$0xff]
        %v373 = vstv %s332
        %v374 = vmul.f32 %v371, %v373
        %v375 = vmul.f32 %v372, %v373
        %v376 = vadd.f32 %v369, %v374
        %v377 = vadd.f32 %v370, %v375
        %v378 = vstv %s333
        %v379 = vmul.f32 %v371, %v378
        %v380 = vmul.f32 %v372, %v378
        %383 = vrot.lane.b32.xlu0 %v379, 127
        %v384 = vpop.permute.xlu0 %383
        %385 = vrot.lane.b32.xlu0 %v380, 127
        %v386 = vpop.permute.xlu0 %385
        %v389 = vadd.f32 %v376, %v384
        %v390 = vadd.f32 %v377, %v386
        %v391 = vstv %s334
        %v392 = vmul.f32 %v371, %v391
        %v393 = vmul.f32 %v372, %v391
        %396 = vrot.lane.b32.xlu0 %v392, 126
        %v397 = vpop.permute.xlu0 %396
        %398 = vrot.lane.b32.xlu0 %v393, 126
        %v399 = vpop.permute.xlu0 %398
        %v402 = vadd.f32 %v389, %v397
        %v403 = vadd.f32 %v390, %v399
        %v404 = vld [vmem:[#allocation2 + $0x2] sm:$0xff]
        %v405 = vld [vmem:[#allocation2 + $0xa] sm:$0xff]
        %v406 = vstv %s335
        %v407 = vmul.f32 %v404, %v406
        %v408 = vmul.f32 %v405, %v406
        %v409 = vadd.f32 %v402, %v407
        %v410 = vadd.f32 %v403, %v408
        %v411 = vstv %s336
        %v412 = vmul.f32 %v404, %v411
        %v413 = vmul.f32 %v405, %v411
        %416 = vrot.lane.b32.xlu0 %v412, 127
        %v417 = vpop.permute.xlu0 %416
        %418 = vrot.lane.b32.xlu0 %v413, 127
        %v419 = vpop.permute.xlu0 %418
        %v422 = vadd.f32 %v409, %v417
        %v423 = vadd.f32 %v410, %v419
        %v424 = vstv %s337
        %v425 = vmul.f32 %v404, %v424
        %v426 = vmul.f32 %v405, %v424
        %429 = vrot.lane.b32.xlu0 %v425, 126
        %v430 = vpop.permute.xlu0 %429
        %431 = vrot.lane.b32.xlu0 %v426, 126
        %v432 = vpop.permute.xlu0 %431
        %v435 = vadd.f32 %v422, %v430
        %v436 = vadd.f32 %v423, %v432
        %vm437 = vcmask 122880
        %438 = vst.msk [vmem:[#allocation3] sm:$0x1] %vm437, %v435
        %v440 = vrot.slane %v435, 5
        %v441 = vrot.slane %v440, 4
        %442 = vrot.lane.b32.xlu0 %v441, 16
        %v443 = vpop.permute.xlu0 %442
        %vm445 = vcmask 254080
        %446 = vst.msk [vmem:[#allocation3] sm:$0x1] %vm445, %v443
        %v447 = vrot.slane %v435, 6
        %v448 = vrot.slane %v447, 4
        %449 = vrot.lane.b32.xlu0 %v448, 32
        %v450 = vpop.permute.xlu0 %449
        %vm452 = vcmask 385280
        %453 = vst.msk [vmem:[#allocation3] sm:$0x1] %vm452, %v450
        %v454 = vrot.slane %v435, 7
        %v455 = vrot.slane %v454, 4
        %456 = vrot.lane.b32.xlu0 %v455, 48
        %v457 = vpop.permute.xlu0 %456
        %vm459 = vcmask 516480
        %460 = vst.msk [vmem:[#allocation3] sm:$0x1] %vm459, %v457
        %v461 = vcombine.high %v435, %v435
        %462 = vrot.lane.b32.xlu0 %v461, 64
        %v463 = vpop.permute.xlu0 %462
        %vm465 = vcmask 647680
        %466 = vst.msk [vmem:[#allocation3] sm:$0x1] %vm465, %v463
        %v467 = vrot.slane %v461, 5
        %v468 = vrot.slane %v467, 4
        %469 = vrot.lane.b32.xlu0 %v468, 80
        %v470 = vpop.permute.xlu0 %469
        %vm472 = vcmask 778880
        %473 = vst.msk [vmem:[#allocation3] sm:$0x1] %vm472, %v470
        %v474 = vrot.slane %v461, 6
        %v475 = vrot.slane %v474, 4
        %476 = vrot.lane.b32.xlu0 %v475, 96
        %v477 = vpop.permute.xlu0 %476
        %vm479 = vcmask 910080
        %480 = vst.msk [vmem:[#allocation3] sm:$0x1] %vm479, %v477
        %v481 = vrot.slane %v461, 7
        %v482 = vrot.slane %v481, 4
        %483 = vrot.lane.b32.xlu0 %v482, 112
        %v484 = vpop.permute.xlu0 %483
        %vm486 = vcmask 1041280
        %487 = vst.msk [vmem:[#allocation3] sm:$0x1] %vm486, %v484
        %488 = vst.msk [vmem:[#allocation3 + $0x4] sm:$0x1] %vm437, %v436
        %v490 = vrot.slane %v436, 5
        %v491 = vrot.slane %v490, 4
        %492 = vrot.lane.b32.xlu0 %v491, 16
        %v493 = vpop.permute.xlu0 %492
        %495 = vst.msk [vmem:[#allocation3 + $0x4] sm:$0x1] %vm445, %v493
        %v496 = vrot.slane %v436, 6
        %v497 = vrot.slane %v496, 4
        %498 = vrot.lane.b32.xlu0 %v497, 32
        %v499 = vpop.permute.xlu0 %498
        %501 = vst.msk [vmem:[#allocation3 + $0x4] sm:$0x1] %vm452, %v499
        %v502 = vrot.slane %v436, 7
        %v503 = vrot.slane %v502, 4
        %504 = vrot.lane.b32.xlu0 %v503, 48
        %v505 = vpop.permute.xlu0 %504
        %507 = vst.msk [vmem:[#allocation3 + $0x4] sm:$0x1] %vm459, %v505
        %v508 = vcombine.high %v436, %v436
        %509 = vrot.lane.b32.xlu0 %v508, 64
        %v510 = vpop.permute.xlu0 %509
        %512 = vst.msk [vmem:[#allocation3 + $0x4] sm:$0x1] %vm465, %v510
        %v513 = vrot.slane %v508, 5
        %v514 = vrot.slane %v513, 4
        %515 = vrot.lane.b32.xlu0 %v514, 80
        %v516 = vpop.permute.xlu0 %515
        %518 = vst.msk [vmem:[#allocation3 + $0x4] sm:$0x1] %vm472, %v516
        %v519 = vrot.slane %v508, 6
        %v520 = vrot.slane %v519, 4
        %521 = vrot.lane.b32.xlu0 %v520, 96
        %v522 = vpop.permute.xlu0 %521
        %524 = vst.msk [vmem:[#allocation3 + $0x4] sm:$0x1] %vm479, %v522
        %v525 = vrot.slane %v508, 7
        %v526 = vrot.slane %v525, 4
        %527 = vrot.lane.b32.xlu0 %v526, 112
        %v528 = vpop.permute.xlu0 %527
        %530 = vst.msk [vmem:[#allocation3 + $0x4] sm:$0x1] %vm486, %v528
        %s531 = sld [smem:[#allocation8 + $0x9]]
        %s532 = sld [smem:[#allocation8 + $0xa]]
        %s533 = sld [smem:[#allocation8 + $0xb]]
        %s534 = sld [smem:[#allocation8 + $0xc]]
        %s535 = sld [smem:[#allocation8 + $0xd]]
        %s536 = sld [smem:[#allocation8 + $0xe]]
        %s537 = sld [smem:[#allocation8 + $0xf]]
        %s538 = sld [smem:[#allocation8 + $0x10]]
        %s539 = sld [smem:[#allocation8 + $0x11]]
        %s540 = scalar_lea.vmem [#allocation2], 24
        %v541 = vld [vmem:[%s540] sm:$0xff]
        %v542 = vld [vmem:[%s540 + $0x8] sm:$0xff]
        %v543 = vstv %s531
        %v544 = vmul.f32 %v541, %v543
        %v545 = vmul.f32 %v542, %v543
        %v546 = vadd.f32 %v544, 0.0
        %v547 = vadd.f32 %v545, 0.0
        %v548 = vstv %s532
        %v549 = vmul.f32 %v541, %v548
        %v550 = vmul.f32 %v542, %v548
        %553 = vrot.lane.b32.xlu0 %v549, 127
        %v554 = vpop.permute.xlu0 %553
        %555 = vrot.lane.b32.xlu0 %v550, 127
        %v556 = vpop.permute.xlu0 %555
        %v559 = vadd.f32 %v546, %v554
        %v560 = vadd.f32 %v547, %v556
        %v561 = vstv %s533
        %v562 = vmul.f32 %v541, %v561
        %v563 = vmul.f32 %v542, %v561
        %566 = vrot.lane.b32.xlu0 %v562, 126
        %v567 = vpop.permute.xlu0 %566
        %568 = vrot.lane.b32.xlu0 %v563, 126
        %v569 = vpop.permute.xlu0 %568
        %v572 = vadd.f32 %v559, %v567
        %v573 = vadd.f32 %v560, %v569
        %v574 = vld [vmem:[%s540 + $0x1] sm:$0xff]
        %v575 = vld [vmem:[%s540 + $0x9] sm:$0xff]
        %v576 = vstv %s534
        %v577 = vmul.f32 %v574, %v576
        %v578 = vmul.f32 %v575, %v576
        %v579 = vadd.f32 %v572, %v577
        %v580 = vadd.f32 %v573, %v578
        %v581 = vstv %s535
        %v582 = vmul.f32 %v574, %v581
        %v583 = vmul.f32 %v575, %v581
        %586 = vrot.lane.b32.xlu0 %v582, 127
        %v587 = vpop.permute.xlu0 %586
        %588 = vrot.lane.b32.xlu0 %v583, 127
        %v589 = vpop.permute.xlu0 %588
        %v592 = vadd.f32 %v579, %v587
        %v593 = vadd.f32 %v580, %v589
        %v594 = vstv %s536
        %v595 = vmul.f32 %v574, %v594
        %v596 = vmul.f32 %v575, %v594
        %599 = vrot.lane.b32.xlu0 %v595, 126
        %v600 = vpop.permute.xlu0 %599
        %601 = vrot.lane.b32.xlu0 %v596, 126
        %v602 = vpop.permute.xlu0 %601
        %v605 = vadd.f32 %v592, %v600
        %v606 = vadd.f32 %v593, %v602
        %v607 = vld [vmem:[%s540 + $0x2] sm:$0xff]
        %v608 = vld [vmem:[%s540 + $0xa] sm:$0xff]
        %v609 = vstv %s537
        %v610 = vmul.f32 %v607, %v609
        %v611 = vmul.f32 %v608, %v609
        %v612 = vadd.f32 %v605, %v610
        %v613 = vadd.f32 %v606, %v611
        %v614 = vstv %s538
        %v615 = vmul.f32 %v607, %v614
        %v616 = vmul.f32 %v608, %v614
        %619 = vrot.lane.b32.xlu0 %v615, 127
        %v620 = vpop.permute.xlu0 %619
        %621 = vrot.lane.b32.xlu0 %v616, 127
        %v622 = vpop.permute.xlu0 %621
        %v625 = vadd.f32 %v612, %v620
        %v626 = vadd.f32 %v613, %v622
        %v627 = vstv %s539
        %v628 = vmul.f32 %v607, %v627
        %v629 = vmul.f32 %v608, %v627
        %632 = vrot.lane.b32.xlu0 %v628, 126
        %v633 = vpop.permute.xlu0 %632
        %634 = vrot.lane.b32.xlu0 %v629, 126
        %v635 = vpop.permute.xlu0 %634
        %v638 = vadd.f32 %v625, %v633
        %v639 = vadd.f32 %v626, %v635
        %640 = vst.msk [vmem:[#allocation3 + $0x1] sm:$0x1] %vm437, %v638
        %v642 = vrot.slane %v638, 5
        %v643 = vrot.slane %v642, 4
        %644 = vrot.lane.b32.xlu0 %v643, 16
        %v645 = vpop.permute.xlu0 %644
        %647 = vst.msk [vmem:[#allocation3 + $0x1] sm:$0x1] %vm445, %v645
        %v648 = vrot.slane %v638, 6
        %v649 = vrot.slane %v648, 4
        %650 = vrot.lane.b32.xlu0 %v649, 32
        %v651 = vpop.permute.xlu0 %650
        %653 = vst.msk [vmem:[#allocation3 + $0x1] sm:$0x1] %vm452, %v651
        %v654 = vrot.slane %v638, 7
        %v655 = vrot.slane %v654, 4
        %656 = vrot.lane.b32.xlu0 %v655, 48
        %v657 = vpop.permute.xlu0 %656
        %659 = vst.msk [vmem:[#allocation3 + $0x1] sm:$0x1] %vm459, %v657
        %v660 = vcombine.high %v638, %v638
        %661 = vrot.lane.b32.xlu0 %v660, 64
        %v662 = vpop.permute.xlu0 %661
        %664 = vst.msk [vmem:[#allocation3 + $0x1] sm:$0x1] %vm465, %v662
        %v665 = vrot.slane %v660, 5
        %v666 = vrot.slane %v665, 4
        %667 = vrot.lane.b32.xlu0 %v666, 80
        %v668 = vpop.permute.xlu0 %667
        %670 = vst.msk [vmem:[#allocation3 + $0x1] sm:$0x1] %vm472, %v668
        %v671 = vrot.slane %v660, 6
        %v672 = vrot.slane %v671, 4
        %673 = vrot.lane.b32.xlu0 %v672, 96
        %v674 = vpop.permute.xlu0 %673
        %676 = vst.msk [vmem:[#allocation3 + $0x1] sm:$0x1] %vm479, %v674
        %v677 = vrot.slane %v660, 7
        %v678 = vrot.slane %v677, 4
        %679 = vrot.lane.b32.xlu0 %v678, 112
        %v680 = vpop.permute.xlu0 %679
        %682 = vst.msk [vmem:[#allocation3 + $0x1] sm:$0x1] %vm486, %v680
        %683 = vst.msk [vmem:[#allocation3 + $0x5] sm:$0x1] %vm437, %v639
        %v685 = vrot.slane %v639, 5
        %v686 = vrot.slane %v685, 4
        %687 = vrot.lane.b32.xlu0 %v686, 16
        %v688 = vpop.permute.xlu0 %687
        %690 = vst.msk [vmem:[#allocation3 + $0x5] sm:$0x1] %vm445, %v688
        %v691 = vrot.slane %v639, 6
        %v692 = vrot.slane %v691, 4
        %693 = vrot.lane.b32.xlu0 %v692, 32
        %v694 = vpop.permute.xlu0 %693
        %696 = vst.msk [vmem:[#allocation3 + $0x5] sm:$0x1] %vm452, %v694
        %v697 = vrot.slane %v639, 7
        %v698 = vrot.slane %v697, 4
        %699 = vrot.lane.b32.xlu0 %v698, 48
        %v700 = vpop.permute.xlu0 %699
        %702 = vst.msk [vmem:[#allocation3 + $0x5] sm:$0x1] %vm459, %v700
        %v703 = vcombine.high %v639, %v639
        %704 = vrot.lane.b32.xlu0 %v703, 64
        %v705 = vpop.permute.xlu0 %704
        %707 = vst.msk [vmem:[#allocation3 + $0x5] sm:$0x1] %vm465, %v705
        %v708 = vrot.slane %v703, 5
        %v709 = vrot.slane %v708, 4
        %710 = vrot.lane.b32.xlu0 %v709, 80
        %v711 = vpop.permute.xlu0 %710
        %713 = vst.msk [vmem:[#allocation3 + $0x5] sm:$0x1] %vm472, %v711
        %v714 = vrot.slane %v703, 6
        %v715 = vrot.slane %v714, 4
        %716 = vrot.lane.b32.xlu0 %v715, 96
        %v717 = vpop.permute.xlu0 %716
        %719 = vst.msk [vmem:[#allocation3 + $0x5] sm:$0x1] %vm479, %v717
        %v720 = vrot.slane %v703, 7
        %v721 = vrot.slane %v720, 4
        %722 = vrot.lane.b32.xlu0 %v721, 112
        %v723 = vpop.permute.xlu0 %722
        %725 = vst.msk [vmem:[#allocation3 + $0x5] sm:$0x1] %vm486, %v723
        %s726 = sld [smem:[#allocation8 + $0x12]]
        %s727 = sld [smem:[#allocation8 + $0x13]]
        %s728 = sld [smem:[#allocation8 + $0x14]]
        %s729 = sld [smem:[#allocation8 + $0x15]]
        %s730 = sld [smem:[#allocation8 + $0x16]]
        %s731 = sld [smem:[#allocation8 + $0x17]]
        %s732 = sld [smem:[#allocation8 + $0x18]]
        %s733 = sld [smem:[#allocation8 + $0x19]]
        %s734 = sld [smem:[#allocation8 + $0x1a]]
        %s735 = scalar_lea.vmem [#allocation2], 48
        %v736 = vld [vmem:[%s735] sm:$0xff]
        %v737 = vld [vmem:[%s735 + $0x8] sm:$0xff]
        %v738 = vstv %s726
        %v739 = vmul.f32 %v736, %v738
        %v740 = vmul.f32 %v737, %v738
        %v741 = vadd.f32 %v739, 0.0
        %v742 = vadd.f32 %v740, 0.0
        %v743 = vstv %s727
        %v744 = vmul.f32 %v736, %v743
        %v745 = vmul.f32 %v737, %v743
        %748 = vrot.lane.b32.xlu0 %v744, 127
        %v749 = vpop.permute.xlu0 %748
        %750 = vrot.lane.b32.xlu0 %v745, 127
        %v751 = vpop.permute.xlu0 %750
        %v754 = vadd.f32 %v741, %v749
        %v755 = vadd.f32 %v742, %v751
        %v756 = vstv %s728
        %v757 = vmul.f32 %v736, %v756
        %v758 = vmul.f32 %v737, %v756
        %761 = vrot.lane.b32.xlu0 %v757, 126
        %v762 = vpop.permute.xlu0 %761
        %763 = vrot.lane.b32.xlu0 %v758, 126
        %v764 = vpop.permute.xlu0 %763
        %v767 = vadd.f32 %v754, %v762
        %v768 = vadd.f32 %v755, %v764
        %v769 = vld [vmem:[%s735 + $0x1] sm:$0xff]
        %v770 = vld [vmem:[%s735 + $0x9] sm:$0xff]
        %v771 = vstv %s729
        %v772 = vmul.f32 %v769, %v771
        %v773 = vmul.f32 %v770, %v771
        %v774 = vadd.f32 %v767, %v772
        %v775 = vadd.f32 %v768, %v773
        %v776 = vstv %s730
        %v777 = vmul.f32 %v769, %v776
        %v778 = vmul.f32 %v770, %v776
        %781 = vrot.lane.b32.xlu0 %v777, 127
        %v782 = vpop.permute.xlu0 %781
        %783 = vrot.lane.b32.xlu0 %v778, 127
        %v784 = vpop.permute.xlu0 %783
        %v787 = vadd.f32 %v774, %v782
        %v788 = vadd.f32 %v775, %v784
        %v789 = vstv %s731
        %v790 = vmul.f32 %v769, %v789
        %v791 = vmul.f32 %v770, %v789
        %794 = vrot.lane.b32.xlu0 %v790, 126
        %v795 = vpop.permute.xlu0 %794
        %796 = vrot.lane.b32.xlu0 %v791, 126
        %v797 = vpop.permute.xlu0 %796
        %v800 = vadd.f32 %v787, %v795
        %v801 = vadd.f32 %v788, %v797
        %v802 = vld [vmem:[%s735 + $0x2] sm:$0xff]
        %v803 = vld [vmem:[%s735 + $0xa] sm:$0xff]
        %v804 = vstv %s732
        %v805 = vmul.f32 %v802, %v804
        %v806 = vmul.f32 %v803, %v804
        %v807 = vadd.f32 %v800, %v805
        %v808 = vadd.f32 %v801, %v806
        %v809 = vstv %s733
        %v810 = vmul.f32 %v802, %v809
        %v811 = vmul.f32 %v803, %v809
        %814 = vrot.lane.b32.xlu0 %v810, 127
        %v815 = vpop.permute.xlu0 %814
        %816 = vrot.lane.b32.xlu0 %v811, 127
        %v817 = vpop.permute.xlu0 %816
        %v820 = vadd.f32 %v807, %v815
        %v821 = vadd.f32 %v808, %v817
        %v822 = vstv %s734
        %v823 = vmul.f32 %v802, %v822
        %v824 = vmul.f32 %v803, %v822
        %827 = vrot.lane.b32.xlu0 %v823, 126
        %v828 = vpop.permute.xlu0 %827
        %829 = vrot.lane.b32.xlu0 %v824, 126
        %v830 = vpop.permute.xlu0 %829
        %v833 = vadd.f32 %v820, %v828
        %v834 = vadd.f32 %v821, %v830
        %835 = vst.msk [vmem:[#allocation3 + $0x2] sm:$0x1] %vm437, %v833
        %v837 = vrot.slane %v833, 5
        %v838 = vrot.slane %v837, 4
        %839 = vrot.lane.b32.xlu0 %v838, 16
        %v840 = vpop.permute.xlu0 %839
        %842 = vst.msk [vmem:[#allocation3 + $0x2] sm:$0x1] %vm445, %v840
        %v843 = vrot.slane %v833, 6
        %v844 = vrot.slane %v843, 4
        %845 = vrot.lane.b32.xlu0 %v844, 32
        %v846 = vpop.permute.xlu0 %845
        %848 = vst.msk [vmem:[#allocation3 + $0x2] sm:$0x1] %vm452, %v846
        %v849 = vrot.slane %v833, 7
        %v850 = vrot.slane %v849, 4
        %851 = vrot.lane.b32.xlu0 %v850, 48
        %v852 = vpop.permute.xlu0 %851
        %854 = vst.msk [vmem:[#allocation3 + $0x2] sm:$0x1] %vm459, %v852
        %v855 = vcombine.high %v833, %v833
        %856 = vrot.lane.b32.xlu0 %v855, 64
        %v857 = vpop.permute.xlu0 %856
        %859 = vst.msk [vmem:[#allocation3 + $0x2] sm:$0x1] %vm465, %v857
        %v860 = vrot.slane %v855, 5
        %v861 = vrot.slane %v860, 4
        %862 = vrot.lane.b32.xlu0 %v861, 80
        %v863 = vpop.permute.xlu0 %862
        %865 = vst.msk [vmem:[#allocation3 + $0x2] sm:$0x1] %vm472, %v863
        %v866 = vrot.slane %v855, 6
        %v867 = vrot.slane %v866, 4
        %868 = vrot.lane.b32.xlu0 %v867, 96
        %v869 = vpop.permute.xlu0 %868
        %871 = vst.msk [vmem:[#allocation3 + $0x2] sm:$0x1] %vm479, %v869
        %v872 = vrot.slane %v855, 7
        %v873 = vrot.slane %v872, 4
        %874 = vrot.lane.b32.xlu0 %v873, 112
        %v875 = vpop.permute.xlu0 %874
        %877 = vst.msk [vmem:[#allocation3 + $0x2] sm:$0x1] %vm486, %v875
        %878 = vst.msk [vmem:[#allocation3 + $0x6] sm:$0x1] %vm437, %v834
        %v880 = vrot.slane %v834, 5
        %v881 = vrot.slane %v880, 4
        %882 = vrot.lane.b32.xlu0 %v881, 16
        %v883 = vpop.permute.xlu0 %882
        %885 = vst.msk [vmem:[#allocation3 + $0x6] sm:$0x1] %vm445, %v883
        %v886 = vrot.slane %v834, 6
        %v887 = vrot.slane %v886, 4
        %888 = vrot.lane.b32.xlu0 %v887, 32
        %v889 = vpop.permute.xlu0 %888
        %891 = vst.msk [vmem:[#allocation3 + $0x6] sm:$0x1] %vm452, %v889
        %v892 = vrot.slane %v834, 7
        %v893 = vrot.slane %v892, 4
        %894 = vrot.lane.b32.xlu0 %v893, 48
        %v895 = vpop.permute.xlu0 %894
        %897 = vst.msk [vmem:[#allocation3 + $0x6] sm:$0x1] %vm459, %v895
        %v898 = vcombine.high %v834, %v834
        %899 = vrot.lane.b32.xlu0 %v898, 64
        %v900 = vpop.permute.xlu0 %899
        %902 = vst.msk [vmem:[#allocation3 + $0x6] sm:$0x1] %vm465, %v900
        %v903 = vrot.slane %v898, 5
        %v904 = vrot.slane %v903, 4
        %905 = vrot.lane.b32.xlu0 %v904, 80
        %v906 = vpop.permute.xlu0 %905
        %908 = vst.msk [vmem:[#allocation3 + $0x6] sm:$0x1] %vm472, %v906
        %v909 = vrot.slane %v898, 6
        %v910 = vrot.slane %v909, 4
        %911 = vrot.lane.b32.xlu0 %v910, 96
        %v912 = vpop.permute.xlu0 %911
        %914 = vst.msk [vmem:[#allocation3 + $0x6] sm:$0x1] %vm479, %v912
        %v915 = vrot.slane %v898, 7
        %v916 = vrot.slane %v915, 4
        %917 = vrot.lane.b32.xlu0 %v916, 112
        %v918 = vpop.permute.xlu0 %917
        %920 = vst.msk [vmem:[#allocation3 + $0x6] sm:$0x1] %vm486, %v918
        %s921 = sld [smem:[#allocation8 + $0x1b]]
        %s922 = sld [smem:[#allocation8 + $0x1c]]
        %s923 = sld [smem:[#allocation8 + $0x1d]]
        %s924 = sld [smem:[#allocation8 + $0x1e]]
        %s925 = sld [smem:[#allocation8 + $0x1f]]
        %s926 = sld [smem:[#allocation8 + $0x20]]
        %s927 = sld [smem:[#allocation8 + $0x21]]
        %s928 = sld [smem:[#allocation8 + $0x22]]
        %s929 = sld [smem:[#allocation8 + $0x23]]
        %s930 = scalar_lea.vmem [#allocation2], 72
        %v931 = vld [vmem:[%s930] sm:$0xff]
        %v932 = vld [vmem:[%s930 + $0x8] sm:$0xff]
        %v933 = vstv %s921
        %v934 = vmul.f32 %v931, %v933
        %v935 = vmul.f32 %v932, %v933
        %v936 = vadd.f32 %v934, 0.0
        %v937 = vadd.f32 %v935, 0.0
        %v938 = vstv %s922
        %v939 = vmul.f32 %v931, %v938
        %v940 = vmul.f32 %v932, %v938
        %943 = vrot.lane.b32.xlu0 %v939, 127
        %v944 = vpop.permute.xlu0 %943
        %945 = vrot.lane.b32.xlu0 %v940, 127
        %v946 = vpop.permute.xlu0 %945
        %v949 = vadd.f32 %v936, %v944
        %v950 = vadd.f32 %v937, %v946
        %v951 = vstv %s923
        %v952 = vmul.f32 %v931, %v951
        %v953 = vmul.f32 %v932, %v951
        %956 = vrot.lane.b32.xlu0 %v952, 126
        %v957 = vpop.permute.xlu0 %956
        %958 = vrot.lane.b32.xlu0 %v953, 126
        %v959 = vpop.permute.xlu0 %958
        %v962 = vadd.f32 %v949, %v957
        %v963 = vadd.f32 %v950, %v959
        %v964 = vld [vmem:[%s930 + $0x1] sm:$0xff]
        %v965 = vld [vmem:[%s930 + $0x9] sm:$0xff]
        %v966 = vstv %s924
        %v967 = vmul.f32 %v964, %v966
        %v968 = vmul.f32 %v965, %v966
        %v969 = vadd.f32 %v962, %v967
        %v970 = vadd.f32 %v963, %v968
        %v971 = vstv %s925
        %v972 = vmul.f32 %v964, %v971
        %v973 = vmul.f32 %v965, %v971
        %976 = vrot.lane.b32.xlu0 %v972, 127
        %v977 = vpop.permute.xlu0 %976
        %978 = vrot.lane.b32.xlu0 %v973, 127
        %v979 = vpop.permute.xlu0 %978
        %v982 = vadd.f32 %v969, %v977
        %v983 = vadd.f32 %v970, %v979
        %v984 = vstv %s926
        %v985 = vmul.f32 %v964, %v984
        %v986 = vmul.f32 %v965, %v984
        %989 = vrot.lane.b32.xlu0 %v985, 126
        %v990 = vpop.permute.xlu0 %989
        %991 = vrot.lane.b32.xlu0 %v986, 126
        %v992 = vpop.permute.xlu0 %991
        %v995 = vadd.f32 %v982, %v990
        %v996 = vadd.f32 %v983, %v992
        %v997 = vld [vmem:[%s930 + $0x2] sm:$0xff]
        %v998 = vld [vmem:[%s930 + $0xa] sm:$0xff]
        %v999 = vstv %s927
        %v1000 = vmul.f32 %v997, %v999
        %v1001 = vmul.f32 %v998, %v999
        %v1002 = vadd.f32 %v995, %v1000
        %v1003 = vadd.f32 %v996, %v1001
        %v1004 = vstv %s928
        %v1005 = vmul.f32 %v997, %v1004
        %v1006 = vmul.f32 %v998, %v1004
        %1009 = vrot.lane.b32.xlu0 %v1005, 127
        %v1010 = vpop.permute.xlu0 %1009
        %1011 = vrot.lane.b32.xlu0 %v1006, 127
        %v1012 = vpop.permute.xlu0 %1011
        %v1015 = vadd.f32 %v1002, %v1010
        %v1016 = vadd.f32 %v1003, %v1012
        %v1017 = vstv %s929
        %v1018 = vmul.f32 %v997, %v1017
        %v1019 = vmul.f32 %v998, %v1017
        %1022 = vrot.lane.b32.xlu0 %v1018, 126
        %v1023 = vpop.permute.xlu0 %1022
        %1024 = vrot.lane.b32.xlu0 %v1019, 126
        %v1025 = vpop.permute.xlu0 %1024
        %v1028 = vadd.f32 %v1015, %v1023
        %v1029 = vadd.f32 %v1016, %v1025
        %1030 = vst.msk [vmem:[#allocation3 + $0x3] sm:$0x1] %vm437, %v1028
        %v1032 = vrot.slane %v1028, 5
        %v1033 = vrot.slane %v1032, 4
        %1034 = vrot.lane.b32.xlu0 %v1033, 16
        %v1035 = vpop.permute.xlu0 %1034
        %1037 = vst.msk [vmem:[#allocation3 + $0x3] sm:$0x1] %vm445, %v1035
        %v1038 = vrot.slane %v1028, 6
        %v1039 = vrot.slane %v1038, 4
        %1040 = vrot.lane.b32.xlu0 %v1039, 32
        %v1041 = vpop.permute.xlu0 %1040
        %1043 = vst.msk [vmem:[#allocation3 + $0x3] sm:$0x1] %vm452, %v1041
        %v1044 = vrot.slane %v1028, 7
        %v1045 = vrot.slane %v1044, 4
        %1046 = vrot.lane.b32.xlu0 %v1045, 48
        %v1047 = vpop.permute.xlu0 %1046
        %1049 = vst.msk [vmem:[#allocation3 + $0x3] sm:$0x1] %vm459, %v1047
        %v1050 = vcombine.high %v1028, %v1028
        %1051 = vrot.lane.b32.xlu0 %v1050, 64
        %v1052 = vpop.permute.xlu0 %1051
        %1054 = vst.msk [vmem:[#allocation3 + $0x3] sm:$0x1] %vm465, %v1052
        %v1055 = vrot.slane %v1050, 5
        %v1056 = vrot.slane %v1055, 4
        %1057 = vrot.lane.b32.xlu0 %v1056, 80
        %v1058 = vpop.permute.xlu0 %1057
        %1060 = vst.msk [vmem:[#allocation3 + $0x3] sm:$0x1] %vm472, %v1058
        %v1061 = vrot.slane %v1050, 6
        %v1062 = vrot.slane %v1061, 4
        %1063 = vrot.lane.b32.xlu0 %v1062, 96
        %v1064 = vpop.permute.xlu0 %1063
        %1066 = vst.msk [vmem:[#allocation3 + $0x3] sm:$0x1] %vm479, %v1064
        %v1067 = vrot.slane %v1050, 7
        %v1068 = vrot.slane %v1067, 4
        %1069 = vrot.lane.b32.xlu0 %v1068, 112
        %v1070 = vpop.permute.xlu0 %1069
        %1072 = vst.msk [vmem:[#allocation3 + $0x3] sm:$0x1] %vm486, %v1070
        %1073 = vst.msk [vmem:[#allocation3 + $0x7] sm:$0x1] %vm437, %v1029
        %v1075 = vrot.slane %v1029, 5
        %v1076 = vrot.slane %v1075, 4
        %1077 = vrot.lane.b32.xlu0 %v1076, 16
        %v1078 = vpop.permute.xlu0 %1077
        %1080 = vst.msk [vmem:[#allocation3 + $0x7] sm:$0x1] %vm445, %v1078
        %v1081 = vrot.slane %v1029, 6
        %v1082 = vrot.slane %v1081, 4
        %1083 = vrot.lane.b32.xlu0 %v1082, 32
        %v1084 = vpop.permute.xlu0 %1083
        %1086 = vst.msk [vmem:[#allocation3 + $0x7] sm:$0x1] %vm452, %v1084
        %v1087 = vrot.slane %v1029, 7
        %v1088 = vrot.slane %v1087, 4
        %1089 = vrot.lane.b32.xlu0 %v1088, 48
        %v1090 = vpop.permute.xlu0 %1089
        %1092 = vst.msk [vmem:[#allocation3 + $0x7] sm:$0x1] %vm459, %v1090
        %v1093 = vcombine.high %v1029, %v1029
        %1094 = vrot.lane.b32.xlu0 %v1093, 64
        %v1095 = vpop.permute.xlu0 %1094
        %1097 = vst.msk [vmem:[#allocation3 + $0x7] sm:$0x1] %vm465, %v1095
        %v1098 = vrot.slane %v1093, 5
        %v1099 = vrot.slane %v1098, 4
        %1100 = vrot.lane.b32.xlu0 %v1099, 80
        %v1101 = vpop.permute.xlu0 %1100
        %1103 = vst.msk [vmem:[#allocation3 + $0x7] sm:$0x1] %vm472, %v1101
        %v1104 = vrot.slane %v1093, 6
        %v1105 = vrot.slane %v1104, 4
        %1106 = vrot.lane.b32.xlu0 %v1105, 96
        %v1107 = vpop.permute.xlu0 %1106
        %1109 = vst.msk [vmem:[#allocation3 + $0x7] sm:$0x1] %vm479, %v1107
        %v1110 = vrot.slane %v1093, 7
        %v1111 = vrot.slane %v1110, 4
        %1112 = vrot.lane.b32.xlu0 %v1111, 112
        %v1113 = vpop.permute.xlu0 %1112
        %1115 = vst.msk [vmem:[#allocation3 + $0x7] sm:$0x1] %vm486, %v1113
        %v1116 = vld [vmem:[#allocation3] ss:$4 sm:$0x3]
        %s1117 = sld [smem:[#allocation9]]
        %v1118 = vstv %s1117
        %v1119 = vmul.f32 %v1116, %v1118
        %s1120 = scalar_lea.vmem [#allocation3], 1
        %v1121 = vld [vmem:[%s1120] ss:$4 sm:$0x3]
        %s1122 = sld [smem:[#allocation9 + $0x1]]
        %v1123 = vstv %s1122
        %v1124 = vmul.f32 %v1121, %v1123
        %v1125 = vadd.f32 %v1119, %v1124
        %s1126 = scalar_lea.vmem [#allocation3], 2
        %v1127 = vld [vmem:[%s1126] ss:$4 sm:$0x3]
        %s1128 = sld [smem:[#allocation9 + $0x2]]
        %v1129 = vstv %s1128
        %v1130 = vmul.f32 %v1127, %v1129
        %v1131 = vadd.f32 %v1125, %v1130
        %s1132 = scalar_lea.vmem [#allocation3], 3
        %v1133 = vld [vmem:[%s1132] ss:$4 sm:$0x3]
        %s1134 = sld [smem:[#allocation9 + $0x3]]
        %v1135 = vstv %s1134
        %v1136 = vmul.f32 %v1133, %v1135
        %v1137 = vadd.f32 %v1131, %v1136
        %v1138 = vld [vmem:[%s3] sm:$0x1]
        %1140 = vset.pattern.permute.xlu0 0
        %1141 = vperm.xlu0 %1140, %v1138
        %v1142 = vpop.permute.xlu0 %1141
        %v1143 = vlaneseq
        %v1144 = vshrl.u32 %v1143, 7
        %v1145 = vsub.s32 0, %v1144
        %v1146 = vrot.slane %v1142, %v1145
        %v1148 = vadd.f32 %v1137, %v1146
        %v1149 = vlaneseq
        %vm1150 = vcmp.ge.s32.totalorder %v1149, 0
        %vm1151 = vcmp.lt.s32.totalorder %v1149, 256
        %vm1152 = vmand %vm1150, %vm1151
        %1153 = vst.msk [vmem:[%s242] ss:$8 sm:$0x3] %vm1152, %v1148
        %1154 = vst.msk [vmem:[%s242] ss:$8 sm:$0x0] %vm1152, %v1148
        %v1155 = vld [vmem:[#allocation3] ss:$4 sm:$0x3]
        %s1156 = sld [smem:[#allocation9 + $0x4]]
        %v1157 = vstv %s1156
        %v1158 = vmul.f32 %v1155, %v1157
        %v1159 = vld [vmem:[%s1120] ss:$4 sm:$0x3]
        %s1160 = sld [smem:[#allocation9 + $0x5]]
        %v1161 = vstv %s1160
        %v1162 = vmul.f32 %v1159, %v1161
        %v1163 = vadd.f32 %v1158, %v1162
        %v1164 = vld [vmem:[%s1126] ss:$4 sm:$0x3]
        %s1165 = sld [smem:[#allocation9 + $0x6]]
        %v1166 = vstv %s1165
        %v1167 = vmul.f32 %v1164, %v1166
        %v1168 = vadd.f32 %v1163, %v1167
        %v1169 = vld [vmem:[%s1132] ss:$4 sm:$0x3]
        %s1170 = sld [smem:[#allocation9 + $0x7]]
        %v1171 = vstv %s1170
        %v1172 = vmul.f32 %v1169, %v1171
        %v1173 = vadd.f32 %v1168, %v1172
        %v1174 = vld [vmem:[%s3 + $0x1] sm:$0x1]
        %1176 = vset.pattern.permute.xlu0 0
        %1177 = vperm.xlu0 %1176, %v1174
        %v1178 = vpop.permute.xlu0 %1177
        %v1179 = vlaneseq
        %v1180 = vshrl.u32 %v1179, 7
        %v1181 = vsub.s32 0, %v1180
        %v1182 = vrot.slane %v1178, %v1181
        %v1184 = vadd.f32 %v1173, %v1182
        %s1185 = scalar_lea.vmem %s242, 1 [#allocation11]
        %1186 = vst.msk [vmem:[%s1185] ss:$8 sm:$0x3] %vm1152, %v1184
        %1187 = vst.msk [vmem:[%s1185] ss:$8 sm:$0x0] %vm1152, %v1184
        %v1188 = vld [vmem:[#allocation3] ss:$4 sm:$0x3]
        %s1189 = sld [smem:[#allocation9 + $0x8]]
        %v1190 = vstv %s1189
        %v1191 = vmul.f32 %v1188, %v1190
        %v1192 = vld [vmem:[%s1120] ss:$4 sm:$0x3]
        %s1193 = sld [smem:[#allocation9 + $0x9]]
        %v1194 = vstv %s1193
        %v1195 = vmul.f32 %v1192, %v1194
        %v1196 = vadd.f32 %v1191, %v1195
        %v1197 = vld [vmem:[%s1126] ss:$4 sm:$0x3]
        %s1198 = sld [smem:[#allocation9 + $0xa]]
        %v1199 = vstv %s1198
        %v1200 = vmul.f32 %v1197, %v1199
        %v1201 = vadd.f32 %v1196, %v1200
        %v1202 = vld [vmem:[%s1132] ss:$4 sm:$0x3]
        %s1203 = sld [smem:[#allocation9 + $0xb]]
        %v1204 = vstv %s1203
        %v1205 = vmul.f32 %v1202, %v1204
        %v1206 = vadd.f32 %v1201, %v1205
        %v1207 = vld [vmem:[%s3 + $0x2] sm:$0x1]
        %1209 = vset.pattern.permute.xlu0 0
        %1210 = vperm.xlu0 %1209, %v1207
        %v1211 = vpop.permute.xlu0 %1210
        %v1212 = vlaneseq
        %v1213 = vshrl.u32 %v1212, 7
        %v1214 = vsub.s32 0, %v1213
        %v1215 = vrot.slane %v1211, %v1214
        %v1217 = vadd.f32 %v1206, %v1215
        %s1218 = scalar_lea.vmem %s242, 2 [#allocation11]
        %1219 = vst.msk [vmem:[%s1218] ss:$8 sm:$0x3] %vm1152, %v1217
        %1220 = vst.msk [vmem:[%s1218] ss:$8 sm:$0x0] %vm1152, %v1217
        %v1221 = vld [vmem:[#allocation3] ss:$4 sm:$0x3]
        %s1222 = sld [smem:[#allocation9 + $0xc]]
        %v1223 = vstv %s1222
        %v1224 = vmul.f32 %v1221, %v1223
        %v1225 = vld [vmem:[%s1120] ss:$4 sm:$0x3]
        %s1226 = sld [smem:[#allocation9 + $0xd]]
        %v1227 = vstv %s1226
        %v1228 = vmul.f32 %v1225, %v1227
        %v1229 = vadd.f32 %v1224, %v1228
        %v1230 = vld [vmem:[%s1126] ss:$4 sm:$0x3]
        %s1231 = sld [smem:[#allocation9 + $0xe]]
        %v1232 = vstv %s1231
        %v1233 = vmul.f32 %v1230, %v1232
        %v1234 = vadd.f32 %v1229, %v1233
        %v1235 = vld [vmem:[%s1132] ss:$4 sm:$0x3]
        %s1236 = sld [smem:[#allocation9 + $0xf]]
        %v1237 = vstv %s1236
        %v1238 = vmul.f32 %v1235, %v1237
        %v1239 = vadd.f32 %v1234, %v1238
        %v1240 = vld [vmem:[%s3 + $0x3] sm:$0x1]
        %1242 = vset.pattern.permute.xlu0 0
        %1243 = vperm.xlu0 %1242, %v1240
        %v1244 = vpop.permute.xlu0 %1243
        %v1245 = vlaneseq
        %v1246 = vshrl.u32 %v1245, 7
        %v1247 = vsub.s32 0, %v1246
        %v1248 = vrot.slane %v1244, %v1247
        %v1250 = vadd.f32 %v1239, %v1248
        %s1251 = scalar_lea.vmem %s242, 3 [#allocation11]
        %1252 = vst.msk [vmem:[%s1251] ss:$8 sm:$0x3] %vm1152, %v1250
        %1253 = vst.msk [vmem:[%s1251] ss:$8 sm:$0x0] %vm1152, %v1250
        %v1254 = vld [vmem:[#allocation3] ss:$4 sm:$0x3]
        %s1255 = sld [smem:[#allocation9 + $0x10]]
        %v1256 = vstv %s1255
        %v1257 = vmul.f32 %v1254, %v1256
        %v1258 = vld [vmem:[%s1120] ss:$4 sm:$0x3]
        %s1259 = sld [smem:[#allocation9 + $0x11]]
        %v1260 = vstv %s1259
        %v1261 = vmul.f32 %v1258, %v1260
        %v1262 = vadd.f32 %v1257, %v1261
        %v1263 = vld [vmem:[%s1126] ss:$4 sm:$0x3]
        %s1264 = sld [smem:[#allocation9 + $0x12]]
        %v1265 = vstv %s1264
        %v1266 = vmul.f32 %v1263, %v1265
        %v1267 = vadd.f32 %v1262, %v1266
        %v1268 = vld [vmem:[%s1132] ss:$4 sm:$0x3]
        %s1269 = sld [smem:[#allocation9 + $0x13]]
        %v1270 = vstv %s1269
        %v1271 = vmul.f32 %v1268, %v1270
        %v1272 = vadd.f32 %v1267, %v1271
        %v1273 = vld [vmem:[%s3 + $0x4] sm:$0x1]
        %1275 = vset.pattern.permute.xlu0 0
        %1276 = vperm.xlu0 %1275, %v1273
        %v1277 = vpop.permute.xlu0 %1276
        %v1278 = vlaneseq
        %v1279 = vshrl.u32 %v1278, 7
        %v1280 = vsub.s32 0, %v1279
        %v1281 = vrot.slane %v1277, %v1280
        %v1283 = vadd.f32 %v1272, %v1281
        %s1284 = scalar_lea.vmem %s242, 4 [#allocation11]
        %1285 = vst.msk [vmem:[%s1284] ss:$8 sm:$0x3] %vm1152, %v1283
        %1286 = vst.msk [vmem:[%s1284] ss:$8 sm:$0x0] %vm1152, %v1283
        %v1287 = vld [vmem:[#allocation3] ss:$4 sm:$0x3]
        %s1288 = sld [smem:[#allocation9 + $0x14]]
        %v1289 = vstv %s1288
        %v1290 = vmul.f32 %v1287, %v1289
        %v1291 = vld [vmem:[%s1120] ss:$4 sm:$0x3]
        %s1292 = sld [smem:[#allocation9 + $0x15]]
        %v1293 = vstv %s1292
        %v1294 = vmul.f32 %v1291, %v1293
        %v1295 = vadd.f32 %v1290, %v1294
        %v1296 = vld [vmem:[%s1126] ss:$4 sm:$0x3]
        %s1297 = sld [smem:[#allocation9 + $0x16]]
        %v1298 = vstv %s1297
        %v1299 = vmul.f32 %v1296, %v1298
        %v1300 = vadd.f32 %v1295, %v1299
        %v1301 = vld [vmem:[%s1132] ss:$4 sm:$0x3]
        %s1302 = sld [smem:[#allocation9 + $0x17]]
        %v1303 = vstv %s1302
        %v1304 = vmul.f32 %v1301, %v1303
        %v1305 = vadd.f32 %v1300, %v1304
        %v1306 = vld [vmem:[%s3 + $0x5] sm:$0x1]
        %1308 = vset.pattern.permute.xlu0 0
        %1309 = vperm.xlu0 %1308, %v1306
        %v1310 = vpop.permute.xlu0 %1309
        %v1311 = vlaneseq
        %v1312 = vshrl.u32 %v1311, 7
        %v1313 = vsub.s32 0, %v1312
        %v1314 = vrot.slane %v1310, %v1313
        %v1316 = vadd.f32 %v1305, %v1314
        %s1317 = scalar_lea.vmem %s242, 5 [#allocation11]
        %1318 = vst.msk [vmem:[%s1317] ss:$8 sm:$0x3] %vm1152, %v1316
        %1319 = vst.msk [vmem:[%s1317] ss:$8 sm:$0x0] %vm1152, %v1316
        %v1320 = vld [vmem:[#allocation3] ss:$4 sm:$0x3]
        %s1321 = sld [smem:[#allocation9 + $0x18]]
        %v1322 = vstv %s1321
        %v1323 = vmul.f32 %v1320, %v1322
        %v1324 = vld [vmem:[%s1120] ss:$4 sm:$0x3]
        %s1325 = sld [smem:[#allocation9 + $0x19]]
        %v1326 = vstv %s1325
        %v1327 = vmul.f32 %v1324, %v1326
        %v1328 = vadd.f32 %v1323, %v1327
        %v1329 = vld [vmem:[%s1126] ss:$4 sm:$0x3]
        %s1330 = sld [smem:[#allocation9 + $0x1a]]
        %v1331 = vstv %s1330
        %v1332 = vmul.f32 %v1329, %v1331
        %v1333 = vadd.f32 %v1328, %v1332
        %v1334 = vld [vmem:[%s1132] ss:$4 sm:$0x3]
        %s1335 = sld [smem:[#allocation9 + $0x1b]]
        %v1336 = vstv %s1335
        %v1337 = vmul.f32 %v1334, %v1336
        %v1338 = vadd.f32 %v1333, %v1337
        %v1339 = vld [vmem:[%s3 + $0x6] sm:$0x1]
        %1341 = vset.pattern.permute.xlu0 0
        %1342 = vperm.xlu0 %1341, %v1339
        %v1343 = vpop.permute.xlu0 %1342
        %v1344 = vlaneseq
        %v1345 = vshrl.u32 %v1344, 7
        %v1346 = vsub.s32 0, %v1345
        %v1347 = vrot.slane %v1343, %v1346
        %v1349 = vadd.f32 %v1338, %v1347
        %s1350 = scalar_lea.vmem %s242, 6 [#allocation11]
        %1351 = vst.msk [vmem:[%s1350] ss:$8 sm:$0x3] %vm1152, %v1349
        %1352 = vst.msk [vmem:[%s1350] ss:$8 sm:$0x0] %vm1152, %v1349
        %v1353 = vld [vmem:[#allocation3] ss:$4 sm:$0x3]
        %s1354 = sld [smem:[#allocation9 + $0x1c]]
        %v1355 = vstv %s1354
        %v1356 = vmul.f32 %v1353, %v1355
        %v1357 = vld [vmem:[%s1120] ss:$4 sm:$0x3]
        %s1358 = sld [smem:[#allocation9 + $0x1d]]
        %v1359 = vstv %s1358
        %v1360 = vmul.f32 %v1357, %v1359
        %v1361 = vadd.f32 %v1356, %v1360
        %v1362 = vld [vmem:[%s1126] ss:$4 sm:$0x3]
        %s1363 = sld [smem:[#allocation9 + $0x1e]]
        %v1364 = vstv %s1363
        %v1365 = vmul.f32 %v1362, %v1364
        %v1366 = vadd.f32 %v1361, %v1365
        %v1367 = vld [vmem:[%s1132] ss:$4 sm:$0x3]
        %s1368 = sld [smem:[#allocation9 + $0x1f]]
        %v1369 = vstv %s1368
        %v1370 = vmul.f32 %v1367, %v1369
        %v1371 = vadd.f32 %v1366, %v1370
        %v1372 = vld [vmem:[%s3 + $0x7] sm:$0x1]
        %1374 = vset.pattern.permute.xlu0 0
        %1375 = vperm.xlu0 %1374, %v1372
        %v1376 = vpop.permute.xlu0 %1375
        %v1377 = vlaneseq
        %v1378 = vshrl.u32 %v1377, 7
        %v1379 = vsub.s32 0, %v1378
        %v1380 = vrot.slane %v1376, %v1379
        %v1382 = vadd.f32 %v1371, %v1380
        %s1383 = scalar_lea.vmem %s242, 7 [#allocation11]
        %1384 = vst.msk [vmem:[%s1383] ss:$8 sm:$0x3] %vm1152, %v1382
        %1385 = vst.msk [vmem:[%s1383] ss:$8 sm:$0x0] %vm1152, %v1382
        %s1386 = sand.u32 %s120, 1
        %s1387 = scalar_lea.sflag [#allocation6], %s1386
        %s1388 = sand.u32 %s120, 1
        %s1389 = smul.addr %s1388, 16
        %s1390 = scalar_lea.vmem [#allocation11], %s1389
        // Predicated region
        $region49: #{tpu_custom_call.1} parent=35 // pred_check
          %p1391 = pneg %p130
        $region50: #{tpu_custom_call.1} parent=35 // pred_check_branch
          %1393 = sbr.rel (%p1391) target = $region52
        $region51: #{tpu_custom_call.1} parent=35 // pred_region
          %s1395 = ssub.s32 256, 256
          %1396 = vsyncadd %s1387, %s1395
          %s1397 = smul.addr %s23, 2
          %s1398 = smul.addr %s1397, 128
          %s1399 = scalar_lea.hbm %s4, %s1398
          %s1401 = sshll.u32 %s1390, 4
          %s1402 = int_to_ptr.vmem [resolvable:$true] %s1401
          %1404 = dma.vmem_to_hbm [thread:$0]  %s1402, 256, %s1399, %s1387
        $region52: #{tpu_custom_call.1} parent=35 // pred_fallthru
          _
      $region36: #{tpu_custom_call.1} parent=5 // pred_fallthru
        _
      %p1405 = scmp.le.s32.totalorder 2, %s18
      // Predicated region
      $region53: #{tpu_custom_call.1} parent=5 // pred_check
        %p1406 = pneg %p1405
      $region54: #{tpu_custom_call.1} parent=5 // pred_check_branch
        %1408 = sbr.rel (%p1406) target = $region56
      $region55: #{tpu_custom_call.1} parent=5 // pred_region
        %s1409 = ssub.s32 %s18, 2
        // Predicated region
        $region57: #{tpu_custom_call.1} parent=55 // pred_check
          %p1410 = pneg %p136
        $region58: #{tpu_custom_call.1} parent=55 // pred_check_branch
          %1412 = sbr.rel (%p1410) target = $region60
        $region59: #{tpu_custom_call.1} parent=55 // pred_region
          %s1413 = sand.u32 %s121, 1
          %s1414 = scalar_lea.sflag [#allocation6], %s1413
          %s1415 = sand.u32 %s121, 1
          %s1416 = smul.addr %s1415, 16
          %s1417 = scalar_lea.vmem [#allocation11], %s1416
          %1418 = dma.done %s1414, 256
        $region60: #{tpu_custom_call.1} parent=55 // pred_fallthru
          _
      $region56: #{tpu_custom_call.1} parent=5 // pred_fallthru
        _
    $region6: #{tpu_custom_call.1} parent=1 // loop_footer
      %s22 = sadd.s32 1, %s18
    $region7: #{tpu_custom_call.1} parent=1 // loop_footer_branch
      %17 = sbr.rel target = $region3
    $region8: #{tpu_custom_call.1} parent=1 // loop_exit
      _
    %1419 = vsyncpa [#allocation5], 1
    %s1420 = scalar_lea.sflag [#allocation5], 1
    %1421 = vsyncpa %s1420, 1
    %1422 = vsyncpa [#allocation6], 1
    %s1423 = scalar_lea.sflag [#allocation6], 1
    %1424 = vsyncpa %s1423, 1
    %1425 = vsyncpa [#allocation7], 1
    %s1426 = scalar_lea.sflag [#allocation7], 1
    %1427 = vsyncpa %s1426, 1
    %1428 = vsyncpa [#allocation10], 1

</llo_original>
